<compile_context>
chip_gen: v7x
topology: tpu7x:2x2x1
jax: 0.10.0
libtpu: 0.0.40
codegen_flags: <defaults>
</compile_context>

<pallas_src>
import functools
import math

import jax
import jax.numpy as jnp
import numpy as np
from jax.experimental import pallas as pl
from jax.experimental.pallas import tpu as pltpu


# ---------------------------------------------------------------------------
# In-kernel helpers
# ---------------------------------------------------------------------------
def _softmax_ctx(s, v_bf):
    """Row softmax of f32 scores, then the bf16 MXU context matmul."""
    s = s - jnp.max(s, axis=-1, keepdims=True)
    p = jnp.exp(s)
    a = p * pl.reciprocal(jnp.sum(p, axis=-1, keepdims=True), approx=True)
    return jnp.dot(a.astype(v_bf.dtype), v_bf, preferred_element_type=jnp.float32)


def _isab_fused_kernel(*refs, num_heads, dim_V, dim_Vp, masked):
    """Fused ISAB step on one flattened batch-row block.

    refs (in order):
      x                      (C, dim_in)   bf16   C = bblk * N
      qp0                    (Rq, dim_Vp)  f32    pre-projected & pre-tiled I queries
      wqk0                   (H, Rq, dim_in) bf16 folded per-head mab0 score weights
      wv0, bv0, wo0, bo0     mab0 V / output projection (bf16 / f32 bias)
      wq1, bq1, wk1, wv1, bv1, wo1, bo1   mab1 projections (scale folded in wk1)
      [mask0 (Rq, C), mask1 (C, Rq)]      only when masked (bblk > 1)
      o                      (C, dim_Vp)   f32
    """
    if masked:
        (x_ref, qp0_ref, wqk0_ref, wv0_ref, bv0_ref, wo0_ref, bo0_ref,
         wq1_ref, bq1_ref, wk1_ref, wv1_ref, bv1_ref, wo1_ref, bo1_ref,
         m0_ref, m1_ref, o_ref) = refs
    else:
        (x_ref, qp0_ref, wqk0_ref, wv0_ref, bv0_ref, wo0_ref, bo0_ref,
         wq1_ref, bq1_ref, wk1_ref, wv1_ref, bv1_ref, wo1_ref, bo1_ref,
         o_ref) = refs

    f32 = jnp.float32
    bf16 = jnp.bfloat16
    ds = dim_V // num_heads
    x = x_ref[...]                                    # (C, dim_in) bf16

    # ------------------ mab0: H = MAB(I, X) --------------------------------
    v0 = jnp.dot(x, wv0_ref[...], preferred_element_type=f32) + bv0_ref[...]
    v0_bf = v0.astype(bf16)
    qp0 = qp0_ref[...]                                # (Rq, dim_Vp) f32
    rq = qp0.shape[0]

    ctx0 = []
    for h in range(num_heads):                        # small static head count
        lo = h * ds
        # folded score weight: contraction over full dim_in (not head_dim);
        # the 1/sqrt(dim_V) scale and Wk0 are already folded in on the host.
        s = jax.lax.dot_general(wqk0_ref[h], x, (((1,), (1,)), ((), ())),
                                preferred_element_type=f32)       # (Rq, C)
        if masked:
            s = s + m0_ref[...]
        ctx0.append(_softmax_ctx(s, v0_bf[:, lo:lo + ds]))

    pad0 = [] if dim_Vp == dim_V else [jnp.zeros((rq, dim_Vp - dim_V), f32)]
    o0 = qp0 + jnp.concatenate(ctx0 + pad0, axis=-1)              # (Rq, dim_Vp)
    o0_bf = o0.astype(bf16)
    hid = o0 + jnp.maximum(
        jnp.dot(o0_bf, wo0_ref[...], preferred_element_type=f32) + bo0_ref[...],
        0.0)                                                       # H, stays in VMEM

    # ------------------ mab1: out = MAB(X, H) ------------------------------
    h_bf = hid.astype(bf16)
    q1 = jnp.dot(x, wq1_ref[...], preferred_element_type=f32) + bq1_ref[...]
    k1 = jnp.dot(h_bf, wk1_ref[...], preferred_element_type=f32)   # scale folded, bk1 dropped
    v1 = jnp.dot(h_bf, wv1_ref[...], preferred_element_type=f32) + bv1_ref[...]
    q1_bf = q1.astype(bf16)
    k1_bf = k1.astype(bf16)
    v1_bf = v1.astype(bf16)
    c_rows = x.shape[0]

    ctx1 = []
    for h in range(num_heads):
        lo = h * ds
        s = jax.lax.dot_general(q1_bf[:, lo:lo + ds], k1_bf[:, lo:lo + ds],
                                (((1,), (1,)), ((), ())),
                                preferred_element_type=f32)        # (C, Rq)
        if masked:
            s = s + m1_ref[...]
        ctx1.append(_softmax_ctx(s, v1_bf[:, lo:lo + ds]))

    pad1 = [] if dim_Vp == dim_V else [jnp.zeros((c_rows, dim_Vp - dim_V), f32)]
    o1 = q1 + jnp.concatenate(ctx1 + pad1, axis=-1)                # (C, dim_Vp)
    o1_bf = o1.astype(bf16)
    o_ref[...] = (o1 + jnp.maximum(
        jnp.dot(o1_bf, wo1_ref[...], preferred_element_type=f32) + bo1_ref[...],
        0.0)).astype(o_ref.dtype)


# ---------------------------------------------------------------------------
# Host-side helpers
# ---------------------------------------------------------------------------
def _round_up(x, m):
    return (x + m - 1) // m * m


def _pad_to(a, shape):
    pads = tuple((0, t - s) for s, t in zip(a.shape, shape))
    return jnp.pad(a, pads) if any(p[1] for p in pads) else a


def _tpu_tuning():
    """Generation-aware row-block target and explicit VMEM limit."""
    try:
        kind = jax.devices()[0].device_kind.lower()
    except Exception:  # defensive
        kind = ""
    if "v7" in kind or "7x" in kind:
        # v7x: 64 MiB VMEM / TensorCore -> smaller blocks, explicit sub-physical limit.
        return 256, 48 * 1024 * 1024
    # v5e / v6e: 128 MiB VMEM; raise the scoped default and use big row blocks.
    return 512, 64 * 1024 * 1024


def _choose_bblk(B, N, nq, target_rows):
    """Pick the batch block so flattened bf16 X rows are 16-sublane aligned,
    row blocks stay near `target_rows`, and the grid keeps >= 2 steps when
    possible (v7x megacore).  The batch is zero-padded to a multiple of bblk
    instead of falling back to a single giant block."""
    need = 16 // math.gcd(N, 16)             # bf16 sublane alignment for X blocks
    want = max(need, min(B, max(1, target_rows // max(N, nq, 1))))
    bblk = max(need, (want // need) * need)
    while bblk > need and -(-B // bblk) < 2:  # prefer at least 2 grid steps
        bblk -= need
    b_pad = -(-B // bblk) * bblk
    return bblk, b_pad


def _block_diag_mask(bblk, nr, nc):
    """(bblk*nr, bblk*nc) additive mask: 0 within a set, -1e9 across sets."""
    rb = np.repeat(np.arange(bblk), nr)
    cb = np.repeat(np.arange(bblk), nc)
    return jnp.asarray(np.where(rb[:, None] == cb[None, :], 0.0, -1e9),
                       dtype=jnp.float32)


def _pack_isab_weights(I, mab0, mab1, num_heads, bblk, dim_Vp):
    """Host-side packing: (in, out) weight orientation, bf16 cast, lane padding
    to dim_Vp, scale folding, softmax-invariant bias (bk) dropping, and the
    mab0 query/score fold (exact linear algebra)."""
    wq0, bq0, wk0, bk0, wv0, bv0, wo0, bo0 = mab0
    wq1, bq1, wk1, bk1, wv1, bv1, wo1, bo1 = mab1
    del bk0, bk1  # K bias shifts every score row by a constant -> softmax-invariant
    dim_V = wq0.shape[0]
    dim_in = wk0.shape[1]
    nq = I.shape[0]
    ds = dim_V // num_heads
    scale = 1.0 / math.sqrt(dim_V)
    bf16 = jnp.bfloat16

    # mab0: inducing queries are batch-invariant -> project on the host, fold
    # (scale * Qp0_h @ Wk0_h) into a single per-head score weight with full
    # dim_in contraction, and pre-tile to the batch block.
    qp0 = I @ wq0.T + bq0                                          # (nq, dim_V)
    wqk0 = jnp.stack([scale * (qp0[:, h * ds:(h + 1) * ds] @ wk0[h * ds:(h + 1) * ds, :])
                      for h in range(num_heads)])                  # (H, nq, dim_in)
    wqk0_t = jnp.tile(wqk0, (1, bblk, 1)).astype(bf16)             # (H, bblk*nq, dim_in)
    qp0_t = _pad_to(jnp.tile(qp0, (bblk, 1)), (bblk * nq, dim_Vp)) # f32 residual queries

    wv0_p = _pad_to(wv0.T, (dim_in, dim_Vp)).astype(bf16)
    bv0_p = _pad_to(bv0[None, :], (1, dim_Vp))
    wo0_p = _pad_to(wo0.T, (dim_Vp, dim_Vp)).astype(bf16)
    bo0_p = _pad_to(bo0[None, :], (1, dim_Vp))

    wq1_p = _pad_to(wq1.T, (dim_in, dim_Vp)).astype(bf16)
    bq1_p = _pad_to(bq1[None, :], (1, dim_Vp))
    wk1_p = _pad_to(scale * wk1.T, (dim_Vp, dim_Vp)).astype(bf16)  # scale folded into K
    wv1_p = _pad_to(wv1.T, (dim_Vp, dim_Vp)).astype(bf16)
    bv1_p = _pad_to(bv1[None, :], (1, dim_Vp))
    wo1_p = _pad_to(wo1.T, (dim_Vp, dim_Vp)).astype(bf16)
    bo1_p = _pad_to(bo1[None, :], (1, dim_Vp))

    return (qp0_t, wqk0_t, wv0_p, bv0_p, wo0_p, bo0_p,
            wq1_p, bq1_p, wk1_p, wv1_p, bv1_p, wo1_p, bo1_p)


# ---------------------------------------------------------------------------
# ISAB forward (fused mab0 + mab1, one pallas_call)
# ---------------------------------------------------------------------------
def isab_forward(X, I, mab0_params, mab1_params, num_heads):
    """X: (B, N, dim_in), I: (num_inds, dim_out) -> (B, N, dim_out)."""
    B, N, dim_in = X.shape
    nq = I.shape[0]
    dim_V = mab0_params[0].shape[0]
    assert dim_V % num_heads == 0, "dim_V must be divisible by num_heads"
    dim_Vp = _round_up(dim_V, 128)          # lane-dense output / aligned slices

    target_rows, vmem_limit = _tpu_tuning()
    bblk, b_pad = _choose_bblk(B, N, nq, target_rows)
    masked = bblk > 1                        # bias add only needed across sets

    packed = _pack_isab_weights(I, mab0_params, mab1_params, num_heads, bblk, dim_Vp)

    # Flatten + zero-pad the batch so every grid step gets a full row block.
    Xf = X.reshape(B * N, dim_in)
    if b_pad > B:
        Xf = jnp.concatenate(
            [Xf, jnp.zeros(((b_pad - B) * N, dim_in), X.dtype)], axis=0)
    Xf = Xf.astype(jnp.bfloat16)             # halve the streamed HBM bytes

    c = bblk * N                             # flattened X rows per grid step
    grid = (b_pad // bblk,)

    def _full(a):
        return pl.BlockSpec(a.shape, lambda b, _nd=a.ndim: (0,) * _nd)

    in_arrays = [Xf] + list(packed)
    in_specs = [pl.BlockSpec((c, dim_in), lambda b: (b, 0))] + [_full(a) for a in packed]
    if masked:
        m0 = _block_diag_mask(bblk, nq, N)   # mab0: inducing rows x X cols
        m1 = _block_diag_mask(bblk, N, nq)   # mab1: X rows x H cols
        in_arrays += [m0, m1]
        in_specs += [_full(m0), _full(m1)]

    kernel = functools.partial(_isab_fused_kernel, num_heads=num_heads,
                               dim_V=dim_V, dim_Vp=dim_Vp, masked=masked)
    out = pl.pallas_call(
        kernel,
        out_shape=jax.ShapeDtypeStruct((b_pad * N, dim_Vp), jnp.float32),
        grid_spec=pltpu.PrefetchScalarGridSpec(
            num_scalar_prefetch=0,
            grid=grid,
            in_specs=in_specs,
            out_specs=pl.BlockSpec((c, dim_Vp), lambda b: (b, 0)),
        ),
        compiler_params=pltpu.CompilerParams(
            dimension_semantics=("parallel",),
            vmem_limit_bytes=vmem_limit),
    )(*in_arrays)

    return out[:B * N, :dim_V].reshape(B, N, dim_V)


# ---------------------------------------------------------------------------
# Parameter construction (deterministic, mirrors nn.Linear / xavier_uniform)
# ---------------------------------------------------------------------------
def _linear_params(key, in_dim, out_dim):
    kw, kb = jax.random.split(key)
    bound = 1.0 / math.sqrt(in_dim)          # PyTorch nn.Linear default init
    W = jax.random.uniform(kw, (out_dim, in_dim), jnp.float32, -bound, bound)
    b = jax.random.uniform(kb, (out_dim,), jnp.float32, -bound, bound)
    return W, b


def make_isab_params(key, dim_in, dim_out, num_inds):
    keys = jax.random.split(key, 10)
    gain = math.sqrt(6.0 / (num_inds + dim_out))     # xavier_uniform on (1, ni, do)
    I = jax.random.uniform(keys[0], (num_inds, dim_out), jnp.float32, -gain, gain)
    # mab0: MAB(dim_Q=dim_out, dim_K=dim_in, dim_V=dim_out)
    mab0 = (_linear_params(keys[1], dim_out, dim_out) +   # fc_q
            _linear_params(keys[2], dim_in, dim_out) +    # fc_k
            _linear_params(keys[3], dim_in, dim_out) +    # fc_v
            _linear_params(keys[4], dim_out, dim_out))    # fc_o
    # mab1: MAB(dim_Q=dim_in, dim_K=dim_out, dim_V=dim_out)
    mab1 = (_linear_params(keys[5], dim_in, dim_out) +
            _linear_params(keys[6], dim_out, dim_out) +
            _linear_params(keys[7], dim_out, dim_out) +
            _linear_params(keys[8], dim_out, dim_out))
    return I, mab0, mab1


# ---------------------------------------------------------------------------
# Pure-JAX reference (original module math, f32)
# ---------------------------------------------------------------------------
def _mab_ref(Q, K, params, num_heads):
    wq, bq, wk, bk, wv, bv, wo, bo = params
    dim_V = wq.shape[0]
    ds = dim_V // num_heads
    Qp = Q @ wq.T + bq
    Kp = K @ wk.T + bk
    Vp = K @ wv.T + bv
    outs = []
    for h in range(num_heads):
        Qh, Kh, Vh = (M[..., h * ds:(h + 1) * ds] for M in (Qp, Kp, Vp))
        A = jax.nn.softmax(jnp.einsum('bqd,bkd->bqk', Qh, Kh) / math.sqrt(dim_V), axis=-1)
        outs.append(Qh + jnp.einsum('bqk,bkd->bqd', A, Vh))
    O = jnp.concatenate(outs, axis=-1)
    return O + jax.nn.relu(O @ wo.T + bo)


def _isab_ref(X, I, mab0_params, mab1_params, num_heads):
    B = X.shape[0]
    I_rep = jnp.broadcast_to(I[None], (B,) + I.shape)
    H = _mab_ref(I_rep, X, mab0_params, num_heads)
    return _mab_ref(X, H, mab1_params, num_heads)


# ---------------------------------------------------------------------------
if __name__ == "__main__":
    def run_check(B, N, dim_in, dim_out, num_heads, num_inds, key):
        kx, kp = jax.random.split(key)
        X = jax.random.normal(kx, (B, N, dim_in), jnp.float32)
        I, mab0, mab1 = make_isab_params(kp, dim_in, dim_out, num_inds)
        out = jax.block_until_ready(isab_forward(X, I, mab0, mab1, num_heads))
        ref = _isab_ref(X, I, mab0, mab1, num_heads)
        # Tolerance accounts for bf16 MXU matmuls + EUP approximate reciprocal.
        np.testing.assert_allclose(np.asarray(out), np.asarray(ref),
                                   rtol=5e-2, atol=5e-2)
        assert out.shape == (B, N, dim_out)

    key = jax.random.PRNGKey(0)
    k1, k2 = jax.random.split(key)
    # Config 1: bblk == 1 -> no mask, grid of 2 steps, 16-row bf16 blocks.
    run_check(B=2, N=16, dim_in=16, dim_out=32, num_heads=4, num_inds=8, key=k1)
    # Config 2: bblk > 1 -> block-diagonal mask + batch-padding path.
    run_check(B=6, N=8, dim_in=16, dim_out=32, num_heads=4, num_inds=4, key=k2)
    print("KERNEL_OK")
</pallas_src>

<mosaic_0001>
module attributes {stable_mosaic.version = 11 : i64} {
  func.func @_isab_fused_kernel(%arg0: i32, %arg1: memref<16x16xbf16, #tpu.memory_space<vmem>>, %arg2: memref<8x128xf32, #tpu.memory_space<vmem>>, %arg3: memref<4x8x16xbf16, #tpu.memory_space<vmem>>, %arg4: memref<16x128xbf16, #tpu.memory_space<vmem>>, %arg5: memref<1x128xf32, #tpu.memory_space<vmem>>, %arg6: memref<128x128xbf16, #tpu.memory_space<vmem>>, %arg7: memref<1x128xf32, #tpu.memory_space<vmem>>, %arg8: memref<16x128xbf16, #tpu.memory_space<vmem>>, %arg9: memref<1x128xf32, #tpu.memory_space<vmem>>, %arg10: memref<128x128xbf16, #tpu.memory_space<vmem>>, %arg11: memref<128x128xbf16, #tpu.memory_space<vmem>>, %arg12: memref<1x128xf32, #tpu.memory_space<vmem>>, %arg13: memref<128x128xbf16, #tpu.memory_space<vmem>>, %arg14: memref<1x128xf32, #tpu.memory_space<vmem>>, %arg15: memref<16x128xf32, #tpu.memory_space<vmem>>) attributes {dimension_semantics = [#tpu.dimension_semantics<parallel>], iteration_bounds = array<i64: 2>, scalar_prefetch = 0 : i64, scratch_operands = 0 : i64, tpu.core_type = #tpu.core_type<tc>, window_params = [{transform_indices = @transform_0, window_bounds = array<i64: 16, 16>}, {pipeline_mode = #tpu.pipeline_mode<synchronous>, transform_indices = @transform_1, window_bounds = array<i64: 8, 128>}, {pipeline_mode = #tpu.pipeline_mode<synchronous>, transform_indices = @transform_2, window_bounds = array<i64: 4, 8, 16>}, {pipeline_mode = #tpu.pipeline_mode<synchronous>, transform_indices = @transform_3, window_bounds = array<i64: 16, 128>}, {pipeline_mode = #tpu.pipeline_mode<synchronous>, transform_indices = @transform_4, window_bounds = array<i64: 1, 128>}, {pipeline_mode = #tpu.pipeline_mode<synchronous>, transform_indices = @transform_5, window_bounds = array<i64: 128, 128>}, {pipeline_mode = #tpu.pipeline_mode<synchronous>, transform_indices = @transform_6, window_bounds = array<i64: 1, 128>}, {pipeline_mode = #tpu.pipeline_mode<synchronous>, transform_indices = @transform_7, window_bounds = array<i64: 16, 128>}, {pipeline_mode = #tpu.pipeline_mode<synchronous>, transform_indices = @transform_8, window_bounds = array<i64: 1, 128>}, {pipeline_mode = #tpu.pipeline_mode<synchronous>, transform_indices = @transform_9, window_bounds = array<i64: 128, 128>}, {pipeline_mode = #tpu.pipeline_mode<synchronous>, transform_indices = @transform_10, window_bounds = array<i64: 128, 128>}, {pipeline_mode = #tpu.pipeline_mode<synchronous>, transform_indices = @transform_11, window_bounds = array<i64: 1, 128>}, {pipeline_mode = #tpu.pipeline_mode<synchronous>, transform_indices = @transform_12, window_bounds = array<i64: 128, 128>}, {pipeline_mode = #tpu.pipeline_mode<synchronous>, transform_indices = @transform_13, window_bounds = array<i64: 1, 128>}, {transform_indices = @transform_14, window_bounds = array<i64: 16, 128>}]} {
    %c0 = arith.constant 0 : index
    %c0_0 = arith.constant 0 : index
    %0 = vector.load %arg1[%c0, %c0_0] : memref<16x16xbf16, #tpu.memory_space<vmem>>, vector<16x16xbf16>
    %c0_1 = arith.constant 0 : index
    %c0_2 = arith.constant 0 : index
    %1 = vector.load %arg4[%c0_1, %c0_2] : memref<16x128xbf16, #tpu.memory_space<vmem>>, vector<16x128xbf16>
    %cst = arith.constant dense<0.000000e+00> : vector<16x128xf32>
    %2 = tpu.matmul %0, %1, %cst {dimension_numbers = #tpu.dot_dimension_numbers<[1], [0], [0], [1], [0, 0, 1, 1], [], []>} : vector<16x16xbf16>, vector<16x128xbf16>, vector<16x128xf32> -> vector<16x128xf32>
    %c0_3 = arith.constant 0 : index
    %c0_4 = arith.constant 0 : index
    %3 = vector.load %arg5[%c0_3, %c0_4] : memref<1x128xf32, #tpu.memory_space<vmem>>, vector<1x128xf32>
    %4 = vector.broadcast %3 : vector<1x128xf32> to vector<16x128xf32>
    %5 = arith.addf %2, %4 : vector<16x128xf32>
    %6 = arith.truncf %5 : vector<16x128xf32> to vector<16x128xbf16>
    %c0_5 = arith.constant 0 : index
    %c0_6 = arith.constant 0 : index
    %7 = vector.load %arg2[%c0_5, %c0_6] : memref<8x128xf32, #tpu.memory_space<vmem>>, vector<8x128xf32>
    %c0_7 = arith.constant 0 : index
    %c0_8 = arith.constant 0 : index
    %c0_9 = arith.constant 0 : index
    %8 = vector.load %arg3[%c0_7, %c0_8, %c0_9] : memref<4x8x16xbf16, #tpu.memory_space<vmem>>, vector<1x8x16xbf16>
    %9 = vector.shape_cast %8 : vector<1x8x16xbf16> to vector<8x16xbf16>
    %cst_10 = arith.constant dense<0.000000e+00> : vector<8x16xf32>
    %10 = tpu.matmul %9, %0, %cst_10 {dimension_numbers = #tpu.dot_dimension_numbers<[1], [1], [0], [0], [0, 0, 1, 0], [], []>} : vector<8x16xbf16>, vector<16x16xbf16>, vector<8x16xf32> -> vector<8x16xf32>
    %11 = vector.extract_strided_slice %6 {offsets = [0, 0], sizes = [16, 8], strides = [1, 1]} : vector<16x128xbf16> to vector<16x8xbf16>
    %cst_11 = arith.constant dense<0xFF800000> : vector<8xf32>
    %12 = vector.multi_reduction <maximumf>, %10, %cst_11 [1] : vector<8x16xf32> to vector<8xf32>
    %13 = vector.shape_cast %12 : vector<8xf32> to vector<8x1xf32>
    %14 = vector.broadcast %13 : vector<8x1xf32> to vector<8x16xf32>
    %15 = arith.subf %10, %14 : vector<8x16xf32>
    %16 = math.exp %15 : vector<8x16xf32>
    %cst_12 = arith.constant dense<0.000000e+00> : vector<8xf32>
    %17 = vector.multi_reduction <add>, %16, %cst_12 [1] : vector<8x16xf32> to vector<8xf32>
    %18 = vector.shape_cast %17 : vector<8xf32> to vector<8x1xf32>
    %19 = tpu.reciprocal %18 {approx = true} : vector<8x1xf32> -> vector<8x1xf32>
    %20 = vector.broadcast %19 : vector<8x1xf32> to vector<8x16xf32>
    %21 = arith.mulf %16, %20 : vector<8x16xf32>
    %22 = arith.truncf %21 : vector<8x16xf32> to vector<8x16xbf16>
    %cst_13 = arith.constant dense<0.000000e+00> : vector<8x8xf32>
    %23 = tpu.matmul %22, %11, %cst_13 {dimension_numbers = #tpu.dot_dimension_numbers<[1], [0], [0], [1], [0, 0, 1, 1], [], []>} : vector<8x16xbf16>, vector<16x8xbf16>, vector<8x8xf32> -> vector<8x8xf32>
    %c1 = arith.constant 1 : index
    %c0_14 = arith.constant 0 : index
    %c0_15 = arith.constant 0 : index
    %24 = vector.load %arg3[%c1, %c0_14, %c0_15] : memref<4x8x16xbf16, #tpu.memory_space<vmem>>, vector<1x8x16xbf16>
    %25 = vector.shape_cast %24 : vector<1x8x16xbf16> to vector<8x16xbf16>
    %cst_16 = arith.constant dense<0.000000e+00> : vector<8x16xf32>
    %26 = tpu.matmul %25, %0, %cst_16 {dimension_numbers = #tpu.dot_dimension_numbers<[1], [1], [0], [0], [0, 0, 1, 0], [], []>} : vector<8x16xbf16>, vector<16x16xbf16>, vector<8x16xf32> -> vector<8x16xf32>
    %27 = vector.extract_strided_slice %6 {offsets = [0, 8], sizes = [16, 8], strides = [1, 1]} : vector<16x128xbf16> to vector<16x8xbf16>
    %cst_17 = arith.constant dense<0xFF800000> : vector<8xf32>
    %28 = vector.multi_reduction <maximumf>, %26, %cst_17 [1] : vector<8x16xf32> to vector<8xf32>
    %29 = vector.shape_cast %28 : vector<8xf32> to vector<8x1xf32>
    %30 = vector.broadcast %29 : vector<8x1xf32> to vector<8x16xf32>
    %31 = arith.subf %26, %30 : vector<8x16xf32>
    %32 = math.exp %31 : vector<8x16xf32>
    %cst_18 = arith.constant dense<0.000000e+00> : vector<8xf32>
    %33 = vector.multi_reduction <add>, %32, %cst_18 [1] : vector<8x16xf32> to vector<8xf32>
    %34 = vector.shape_cast %33 : vector<8xf32> to vector<8x1xf32>
    %35 = tpu.reciprocal %34 {approx = true} : vector<8x1xf32> -> vector<8x1xf32>
    %36 = vector.broadcast %35 : vector<8x1xf32> to vector<8x16xf32>
    %37 = arith.mulf %32, %36 : vector<8x16xf32>
    %38 = arith.truncf %37 : vector<8x16xf32> to vector<8x16xbf16>
    %cst_19 = arith.constant dense<0.000000e+00> : vector<8x8xf32>
    %39 = tpu.matmul %38, %27, %cst_19 {dimension_numbers = #tpu.dot_dimension_numbers<[1], [0], [0], [1], [0, 0, 1, 1], [], []>} : vector<8x16xbf16>, vector<16x8xbf16>, vector<8x8xf32> -> vector<8x8xf32>
    %c2 = arith.constant 2 : index
    %c0_20 = arith.constant 0 : index
    %c0_21 = arith.constant 0 : index
    %40 = vector.load %arg3[%c2, %c0_20, %c0_21] : memref<4x8x16xbf16, #tpu.memory_space<vmem>>, vector<1x8x16xbf16>
    %41 = vector.shape_cast %40 : vector<1x8x16xbf16> to vector<8x16xbf16>
    %cst_22 = arith.constant dense<0.000000e+00> : vector<8x16xf32>
    %42 = tpu.matmul %41, %0, %cst_22 {dimension_numbers = #tpu.dot_dimension_numbers<[1], [1], [0], [0], [0, 0, 1, 0], [], []>} : vector<8x16xbf16>, vector<16x16xbf16>, vector<8x16xf32> -> vector<8x16xf32>
    %43 = vector.extract_strided_slice %6 {offsets = [0, 16], sizes = [16, 8], strides = [1, 1]} : vector<16x128xbf16> to vector<16x8xbf16>
    %cst_23 = arith.constant dense<0xFF800000> : vector<8xf32>
    %44 = vector.multi_reduction <maximumf>, %42, %cst_23 [1] : vector<8x16xf32> to vector<8xf32>
    %45 = vector.shape_cast %44 : vector<8xf32> to vector<8x1xf32>
    %46 = vector.broadcast %45 : vector<8x1xf32> to vector<8x16xf32>
    %47 = arith.subf %42, %46 : vector<8x16xf32>
    %48 = math.exp %47 : vector<8x16xf32>
    %cst_24 = arith.constant dense<0.000000e+00> : vector<8xf32>
    %49 = vector.multi_reduction <add>, %48, %cst_24 [1] : vector<8x16xf32> to vector<8xf32>
    %50 = vector.shape_cast %49 : vector<8xf32> to vector<8x1xf32>
    %51 = tpu.reciprocal %50 {approx = true} : vector<8x1xf32> -> vector<8x1xf32>
    %52 = vector.broadcast %51 : vector<8x1xf32> to vector<8x16xf32>
    %53 = arith.mulf %48, %52 : vector<8x16xf32>
    %54 = arith.truncf %53 : vector<8x16xf32> to vector<8x16xbf16>
    %cst_25 = arith.constant dense<0.000000e+00> : vector<8x8xf32>
    %55 = tpu.matmul %54, %43, %cst_25 {dimension_numbers = #tpu.dot_dimension_numbers<[1], [0], [0], [1], [0, 0, 1, 1], [], []>} : vector<8x16xbf16>, vector<16x8xbf16>, vector<8x8xf32> -> vector<8x8xf32>
    %c3 = arith.constant 3 : index
    %c0_26 = arith.constant 0 : index
    %c0_27 = arith.constant 0 : index
    %56 = vector.load %arg3[%c3, %c0_26, %c0_27] : memref<4x8x16xbf16, #tpu.memory_space<vmem>>, vector<1x8x16xbf16>
    %57 = vector.shape_cast %56 : vector<1x8x16xbf16> to vector<8x16xbf16>
    %cst_28 = arith.constant dense<0.000000e+00> : vector<8x16xf32>
    %58 = tpu.matmul %57, %0, %cst_28 {dimension_numbers = #tpu.dot_dimension_numbers<[1], [1], [0], [0], [0, 0, 1, 0], [], []>} : vector<8x16xbf16>, vector<16x16xbf16>, vector<8x16xf32> -> vector<8x16xf32>
    %59 = vector.extract_strided_slice %6 {offsets = [0, 24], sizes = [16, 8], strides = [1, 1]} : vector<16x128xbf16> to vector<16x8xbf16>
    %cst_29 = arith.constant dense<0xFF800000> : vector<8xf32>
    %60 = vector.multi_reduction <maximumf>, %58, %cst_29 [1] : vector<8x16xf32> to vector<8xf32>
    %61 = vector.shape_cast %60 : vector<8xf32> to vector<8x1xf32>
    %62 = vector.broadcast %61 : vector<8x1xf32> to vector<8x16xf32>
    %63 = arith.subf %58, %62 : vector<8x16xf32>
    %64 = math.exp %63 : vector<8x16xf32>
    %cst_30 = arith.constant dense<0.000000e+00> : vector<8xf32>
    %65 = vector.multi_reduction <add>, %64, %cst_30 [1] : vector<8x16xf32> to vector<8xf32>
    %66 = vector.shape_cast %65 : vector<8xf32> to vector<8x1xf32>
    %67 = tpu.reciprocal %66 {approx = true} : vector<8x1xf32> -> vector<8x1xf32>
    %68 = vector.broadcast %67 : vector<8x1xf32> to vector<8x16xf32>
    %69 = arith.mulf %64, %68 : vector<8x16xf32>
    %70 = arith.truncf %69 : vector<8x16xf32> to vector<8x16xbf16>
    %cst_31 = arith.constant dense<0.000000e+00> : vector<8x8xf32>
    %71 = tpu.matmul %70, %59, %cst_31 {dimension_numbers = #tpu.dot_dimension_numbers<[1], [0], [0], [1], [0, 0, 1, 1], [], []>} : vector<8x16xbf16>, vector<16x8xbf16>, vector<8x8xf32> -> vector<8x8xf32>
    %cst_32 = arith.constant 0.000000e+00 : f32
    %72 = vector.broadcast %cst_32 : f32 to vector<8x96xf32>
    %73 = tpu.concatenate %23, %39, %55, %71, %72 in 1 : vector<8x8xf32>, vector<8x8xf32>, vector<8x8xf32>, vector<8x8xf32>, vector<8x96xf32> -> vector<8x128xf32>
    %74 = arith.addf %7, %73 : vector<8x128xf32>
    %75 = arith.truncf %74 : vector<8x128xf32> to vector<8x128xbf16>
    %c0_33 = arith.constant 0 : index
    %c0_34 = arith.constant 0 : index
    %76 = vector.load %arg6[%c0_33, %c0_34] : memref<128x128xbf16, #tpu.memory_space<vmem>>, vector<128x128xbf16>
    %cst_35 = arith.constant dense<0.000000e+00> : vector<8x128xf32>
    %77 = tpu.matmul %75, %76, %cst_35 {dimension_numbers = #tpu.dot_dimension_numbers<[1], [0], [0], [1], [0, 0, 1, 1], [], []>} : vector<8x128xbf16>, vector<128x128xbf16>, vector<8x128xf32> -> vector<8x128xf32>
    %c0_36 = arith.constant 0 : index
    %c0_37 = arith.constant 0 : index
    %78 = vector.load %arg7[%c0_36, %c0_37] : memref<1x128xf32, #tpu.memory_space<vmem>>, vector<1x128xf32>
    %79 = vector.broadcast %78 : vector<1x128xf32> to vector<8x128xf32>
    %80 = arith.addf %77, %79 : vector<8x128xf32>
    %cst_38 = arith.constant 0.000000e+00 : f32
    %81 = vector.broadcast %cst_38 : f32 to vector<8x128xf32>
    %82 = arith.maximumf %80, %81 : vector<8x128xf32>
    %83 = arith.addf %74, %82 : vector<8x128xf32>
    %84 = arith.truncf %83 : vector<8x128xf32> to vector<8x128xbf16>
    %c0_39 = arith.constant 0 : index
    %c0_40 = arith.constant 0 : index
    %85 = vector.load %arg8[%c0_39, %c0_40] : memref<16x128xbf16, #tpu.memory_space<vmem>>, vector<16x128xbf16>
    %cst_41 = arith.constant dense<0.000000e+00> : vector<16x128xf32>
    %86 = tpu.matmul %0, %85, %cst_41 {dimension_numbers = #tpu.dot_dimension_numbers<[1], [0], [0], [1], [0, 0, 1, 1], [], []>} : vector<16x16xbf16>, vector<16x128xbf16>, vector<16x128xf32> -> vector<16x128xf32>
    %c0_42 = arith.constant 0 : index
    %c0_43 = arith.constant 0 : index
    %87 = vector.load %arg9[%c0_42, %c0_43] : memref<1x128xf32, #tpu.memory_space<vmem>>, vector<1x128xf32>
    %88 = vector.broadcast %87 : vector<1x128xf32> to vector<16x128xf32>
    %89 = arith.addf %86, %88 : vector<16x128xf32>
    %c0_44 = arith.constant 0 : index
    %c0_45 = arith.constant 0 : index
    %90 = vector.load %arg10[%c0_44, %c0_45] : memref<128x128xbf16, #tpu.memory_space<vmem>>, vector<128x128xbf16>
    %cst_46 = arith.constant dense<0.000000e+00> : vector<8x128xf32>
    %91 = tpu.matmul %84, %90, %cst_46 {dimension_numbers = #tpu.dot_dimension_numbers<[1], [0], [0], [1], [0, 0, 1, 1], [], []>} : vector<8x128xbf16>, vector<128x128xbf16>, vector<8x128xf32> -> vector<8x128xf32>
    %c0_47 = arith.constant 0 : index
    %c0_48 = arith.constant 0 : index
    %92 = vector.load %arg11[%c0_47, %c0_48] : memref<128x128xbf16, #tpu.memory_space<vmem>>, vector<128x128xbf16>
    %cst_49 = arith.constant dense<0.000000e+00> : vector<8x128xf32>
    %93 = tpu.matmul %84, %92, %cst_49 {dimension_numbers = #tpu.dot_dimension_numbers<[1], [0], [0], [1], [0, 0, 1, 1], [], []>} : vector<8x128xbf16>, vector<128x128xbf16>, vector<8x128xf32> -> vector<8x128xf32>
    %c0_50 = arith.constant 0 : index
    %c0_51 = arith.constant 0 : index
    %94 = vector.load %arg12[%c0_50, %c0_51] : memref<1x128xf32, #tpu.memory_space<vmem>>, vector<1x128xf32>
    %95 = vector.broadcast %94 : vector<1x128xf32> to vector<8x128xf32>
    %96 = arith.addf %93, %95 : vector<8x128xf32>
    %97 = arith.truncf %89 : vector<16x128xf32> to vector<16x128xbf16>
    %98 = arith.truncf %91 : vector<8x128xf32> to vector<8x128xbf16>
    %99 = arith.truncf %96 : vector<8x128xf32> to vector<8x128xbf16>
    %100 = vector.extract_strided_slice %97 {offsets = [0, 0], sizes = [16, 8], strides = [1, 1]} : vector<16x128xbf16> to vector<16x8xbf16>
    %101 = vector.extract_strided_slice %98 {offsets = [0, 0], sizes = [8, 8], strides = [1, 1]} : vector<8x128xbf16> to vector<8x8xbf16>
    %cst_52 = arith.constant dense<0.000000e+00> : vector<16x8xf32>
    %102 = tpu.matmul %100, %101, %cst_52 {dimension_numbers = #tpu.dot_dimension_numbers<[1], [1], [0], [0], [0, 0, 1, 0], [], []>} : vector<16x8xbf16>, vector<8x8xbf16>, vector<16x8xf32> -> vector<16x8xf32>
    %103 = vector.extract_strided_slice %99 {offsets = [0, 0], sizes = [8, 8], strides = [1, 1]} : vector<8x128xbf16> to vector<8x8xbf16>
    %cst_53 = arith.constant dense<0xFF800000> : vector<16xf32>
    %104 = vector.multi_reduction <maximumf>, %102, %cst_53 [1] : vector<16x8xf32> to vector<16xf32>
    %105 = vector.shape_cast %104 : vector<16xf32> to vector<16x1xf32>
    %106 = vector.broadcast %105 : vector<16x1xf32> to vector<16x8xf32>
    %107 = arith.subf %102, %106 : vector<16x8xf32>
    %108 = math.exp %107 : vector<16x8xf32>
    %cst_54 = arith.constant dense<0.000000e+00> : vector<16xf32>
    %109 = vector.multi_reduction <add>, %108, %cst_54 [1] : vector<16x8xf32> to vector<16xf32>
    %110 = vector.shape_cast %109 : vector<16xf32> to vector<16x1xf32>
    %111 = tpu.reciprocal %110 {approx = true} : vector<16x1xf32> -> vector<16x1xf32>
    %112 = vector.broadcast %111 : vector<16x1xf32> to vector<16x8xf32>
    %113 = arith.mulf %108, %112 : vector<16x8xf32>
    %114 = arith.truncf %113 : vector<16x8xf32> to vector<16x8xbf16>
    %cst_55 = arith.constant dense<0.000000e+00> : vector<16x8xf32>
    %115 = tpu.matmul %114, %103, %cst_55 {dimension_numbers = #tpu.dot_dimension_numbers<[1], [0], [0], [1], [0, 0, 1, 1], [], []>} : vector<16x8xbf16>, vector<8x8xbf16>, vector<16x8xf32> -> vector<16x8xf32>
    %116 = vector.extract_strided_slice %97 {offsets = [0, 8], sizes = [16, 8], strides = [1, 1]} : vector<16x128xbf16> to vector<16x8xbf16>
    %117 = vector.extract_strided_slice %98 {offsets = [0, 8], sizes = [8, 8], strides = [1, 1]} : vector<8x128xbf16> to vector<8x8xbf16>
    %cst_56 = arith.constant dense<0.000000e+00> : vector<16x8xf32>
    %118 = tpu.matmul %116, %117, %cst_56 {dimension_numbers = #tpu.dot_dimension_numbers<[1], [1], [0], [0], [0, 0, 1, 0], [], []>} : vector<16x8xbf16>, vector<8x8xbf16>, vector<16x8xf32> -> vector<16x8xf32>
    %119 = vector.extract_strided_slice %99 {offsets = [0, 8], sizes = [8, 8], strides = [1, 1]} : vector<8x128xbf16> to vector<8x8xbf16>
    %cst_57 = arith.constant dense<0xFF800000> : vector<16xf32>
    %120 = vector.multi_reduction <maximumf>, %118, %cst_57 [1] : vector<16x8xf32> to vector<16xf32>
    %121 = vector.shape_cast %120 : vector<16xf32> to vector<16x1xf32>
    %122 = vector.broadcast %121 : vector<16x1xf32> to vector<16x8xf32>
    %123 = arith.subf %118, %122 : vector<16x8xf32>
    %124 = math.exp %123 : vector<16x8xf32>
    %cst_58 = arith.constant dense<0.000000e+00> : vector<16xf32>
    %125 = vector.multi_reduction <add>, %124, %cst_58 [1] : vector<16x8xf32> to vector<16xf32>
    %126 = vector.shape_cast %125 : vector<16xf32> to vector<16x1xf32>
    %127 = tpu.reciprocal %126 {approx = true} : vector<16x1xf32> -> vector<16x1xf32>
    %128 = vector.broadcast %127 : vector<16x1xf32> to vector<16x8xf32>
    %129 = arith.mulf %124, %128 : vector<16x8xf32>
    %130 = arith.truncf %129 : vector<16x8xf32> to vector<16x8xbf16>
    %cst_59 = arith.constant dense<0.000000e+00> : vector<16x8xf32>
    %131 = tpu.matmul %130, %119, %cst_59 {dimension_numbers = #tpu.dot_dimension_numbers<[1], [0], [0], [1], [0, 0, 1, 1], [], []>} : vector<16x8xbf16>, vector<8x8xbf16>, vector<16x8xf32> -> vector<16x8xf32>
    %132 = vector.extract_strided_slice %97 {offsets = [0, 16], sizes = [16, 8], strides = [1, 1]} : vector<16x128xbf16> to vector<16x8xbf16>
    %133 = vector.extract_strided_slice %98 {offsets = [0, 16], sizes = [8, 8], strides = [1, 1]} : vector<8x128xbf16> to vector<8x8xbf16>
    %cst_60 = arith.constant dense<0.000000e+00> : vector<16x8xf32>
    %134 = tpu.matmul %132, %133, %cst_60 {dimension_numbers = #tpu.dot_dimension_numbers<[1], [1], [0], [0], [0, 0, 1, 0], [], []>} : vector<16x8xbf16>, vector<8x8xbf16>, vector<16x8xf32> -> vector<16x8xf32>
    %135 = vector.extract_strided_slice %99 {offsets = [0, 16], sizes = [8, 8], strides = [1, 1]} : vector<8x128xbf16> to vector<8x8xbf16>
    %cst_61 = arith.constant dense<0xFF800000> : vector<16xf32>
    %136 = vector.multi_reduction <maximumf>, %134, %cst_61 [1] : vector<16x8xf32> to vector<16xf32>
    %137 = vector.shape_cast %136 : vector<16xf32> to vector<16x1xf32>
    %138 = vector.broadcast %137 : vector<16x1xf32> to vector<16x8xf32>
    %139 = arith.subf %134, %138 : vector<16x8xf32>
    %140 = math.exp %139 : vector<16x8xf32>
    %cst_62 = arith.constant dense<0.000000e+00> : vector<16xf32>
    %141 = vector.multi_reduction <add>, %140, %cst_62 [1] : vector<16x8xf32> to vector<16xf32>
    %142 = vector.shape_cast %141 : vector<16xf32> to vector<16x1xf32>
    %143 = tpu.reciprocal %142 {approx = true} : vector<16x1xf32> -> vector<16x1xf32>
    %144 = vector.broadcast %143 : vector<16x1xf32> to vector<16x8xf32>
    %145 = arith.mulf %140, %144 : vector<16x8xf32>
    %146 = arith.truncf %145 : vector<16x8xf32> to vector<16x8xbf16>
    %cst_63 = arith.constant dense<0.000000e+00> : vector<16x8xf32>
    %147 = tpu.matmul %146, %135, %cst_63 {dimension_numbers = #tpu.dot_dimension_numbers<[1], [0], [0], [1], [0, 0, 1, 1], [], []>} : vector<16x8xbf16>, vector<8x8xbf16>, vector<16x8xf32> -> vector<16x8xf32>
    %148 = vector.extract_strided_slice %97 {offsets = [0, 24], sizes = [16, 8], strides = [1, 1]} : vector<16x128xbf16> to vector<16x8xbf16>
    %149 = vector.extract_strided_slice %98 {offsets = [0, 24], sizes = [8, 8], strides = [1, 1]} : vector<8x128xbf16> to vector<8x8xbf16>
    %cst_64 = arith.constant dense<0.000000e+00> : vector<16x8xf32>
    %150 = tpu.matmul %148, %149, %cst_64 {dimension_numbers = #tpu.dot_dimension_numbers<[1], [1], [0], [0], [0, 0, 1, 0], [], []>} : vector<16x8xbf16>, vector<8x8xbf16>, vector<16x8xf32> -> vector<16x8xf32>
    %151 = vector.extract_strided_slice %99 {offsets = [0, 24], sizes = [8, 8], strides = [1, 1]} : vector<8x128xbf16> to vector<8x8xbf16>
    %cst_65 = arith.constant dense<0xFF800000> : vector<16xf32>
    %152 = vector.multi_reduction <maximumf>, %150, %cst_65 [1] : vector<16x8xf32> to vector<16xf32>
    %153 = vector.shape_cast %152 : vector<16xf32> to vector<16x1xf32>
    %154 = vector.broadcast %153 : vector<16x1xf32> to vector<16x8xf32>
    %155 = arith.subf %150, %154 : vector<16x8xf32>
    %156 = math.exp %155 : vector<16x8xf32>
    %cst_66 = arith.constant dense<0.000000e+00> : vector<16xf32>
    %157 = vector.multi_reduction <add>, %156, %cst_66 [1] : vector<16x8xf32> to vector<16xf32>
    %158 = vector.shape_cast %157 : vector<16xf32> to vector<16x1xf32>
    %159 = tpu.reciprocal %158 {approx = true} : vector<16x1xf32> -> vector<16x1xf32>
    %160 = vector.broadcast %159 : vector<16x1xf32> to vector<16x8xf32>
    %161 = arith.mulf %156, %160 : vector<16x8xf32>
    %162 = arith.truncf %161 : vector<16x8xf32> to vector<16x8xbf16>
    %cst_67 = arith.constant dense<0.000000e+00> : vector<16x8xf32>
    %163 = tpu.matmul %162, %151, %cst_67 {dimension_numbers = #tpu.dot_dimension_numbers<[1], [0], [0], [1], [0, 0, 1, 1], [], []>} : vector<16x8xbf16>, vector<8x8xbf16>, vector<16x8xf32> -> vector<16x8xf32>
    %cst_68 = arith.constant 0.000000e+00 : f32
    %164 = vector.broadcast %cst_68 : f32 to vector<16x96xf32>
    %165 = tpu.concatenate %115, %131, %147, %163, %164 in 1 : vector<16x8xf32>, vector<16x8xf32>, vector<16x8xf32>, vector<16x8xf32>, vector<16x96xf32> -> vector<16x128xf32>
    %166 = arith.addf %89, %165 : vector<16x128xf32>
    %167 = arith.truncf %166 : vector<16x128xf32> to vector<16x128xbf16>
    %c0_69 = arith.constant 0 : index
    %c0_70 = arith.constant 0 : index
    %168 = vector.load %arg13[%c0_69, %c0_70] : memref<128x128xbf16, #tpu.memory_space<vmem>>, vector<128x128xbf16>
    %cst_71 = arith.constant dense<0.000000e+00> : vector<16x128xf32>
    %169 = tpu.matmul %167, %168, %cst_71 {dimension_numbers = #tpu.dot_dimension_numbers<[1], [0], [0], [1], [0, 0, 1, 1], [], []>} : vector<16x128xbf16>, vector<128x128xbf16>, vector<16x128xf32> -> vector<16x128xf32>
    %c0_72 = arith.constant 0 : index
    %c0_73 = arith.constant 0 : index
    %170 = vector.load %arg14[%c0_72, %c0_73] : memref<1x128xf32, #tpu.memory_space<vmem>>, vector<1x128xf32>
    %171 = vector.broadcast %170 : vector<1x128xf32> to vector<16x128xf32>
    %172 = arith.addf %169, %171 : vector<16x128xf32>
    %cst_74 = arith.constant 0.000000e+00 : f32
    %173 = vector.broadcast %cst_74 : f32 to vector<16x128xf32>
    %174 = arith.maximumf %172, %173 : vector<16x128xf32>
    %175 = arith.addf %166, %174 : vector<16x128xf32>
    %c0_75 = arith.constant 0 : index
    %c0_76 = arith.constant 0 : index
    %176 = vector.load %arg15[%c0_75, %c0_76] : memref<16x128xf32, #tpu.memory_space<vmem>>, vector<16x128xf32>
    tpu.vector_store %arg15[%c0_75, %c0_76], %175 {strides = array<i32>} : memref<16x128xf32, #tpu.memory_space<vmem>>, vector<16x128xf32>,
    return
  }
  func.func @transform_0(%arg0: i32) -> (i32, i32) {
    %c0_i32 = arith.constant 0 : i32
    %c0_i32_0 = arith.constant 0 : i32
    return %arg0, %c0_i32 : i32, i32
  }
  func.func @transform_1(%arg0: i32) -> (i32, i32) {
    %c0_i32 = arith.constant 0 : i32
    %c0_i32_0 = arith.constant 0 : i32
    %c0_i32_1 = arith.constant 0 : i32
    return %c0_i32, %c0_i32_0 : i32, i32
  }
  func.func @transform_2(%arg0: i32) -> (i32, i32, i32) {
    %c0_i32 = arith.constant 0 : i32
    %c0_i32_0 = arith.constant 0 : i32
    %c0_i32_1 = arith.constant 0 : i32
    %c0_i32_2 = arith.constant 0 : i32
    return %c0_i32, %c0_i32_0, %c0_i32_1 : i32, i32, i32
  }
  func.func @transform_3(%arg0: i32) -> (i32, i32) {
    %c0_i32 = arith.constant 0 : i32
    %c0_i32_0 = arith.constant 0 : i32
    %c0_i32_1 = arith.constant 0 : i32
    return %c0_i32, %c0_i32_0 : i32, i32
  }
  func.func @transform_4(%arg0: i32) -> (i32, i32) {
    %c0_i32 = arith.constant 0 : i32
    %c0_i32_0 = arith.constant 0 : i32
    %c0_i32_1 = arith.constant 0 : i32
    return %c0_i32, %c0_i32_0 : i32, i32
  }
  func.func @transform_5(%arg0: i32) -> (i32, i32) {
    %c0_i32 = arith.constant 0 : i32
    %c0_i32_0 = arith.constant 0 : i32
    %c0_i32_1 = arith.constant 0 : i32
    return %c0_i32, %c0_i32_0 : i32, i32
  }
  func.func @transform_6(%arg0: i32) -> (i32, i32) {
    %c0_i32 = arith.constant 0 : i32
    %c0_i32_0 = arith.constant 0 : i32
    %c0_i32_1 = arith.constant 0 : i32
    return %c0_i32, %c0_i32_0 : i32, i32
  }
  func.func @transform_7(%arg0: i32) -> (i32, i32) {
    %c0_i32 = arith.constant 0 : i32
    %c0_i32_0 = arith.constant 0 : i32
    %c0_i32_1 = arith.constant 0 : i32
    return %c0_i32, %c0_i32_0 : i32, i32
  }
  func.func @transform_8(%arg0: i32) -> (i32, i32) {
    %c0_i32 = arith.constant 0 : i32
    %c0_i32_0 = arith.constant 0 : i32
    %c0_i32_1 = arith.constant 0 : i32
    return %c0_i32, %c0_i32_0 : i32, i32
  }
  func.func @transform_9(%arg0: i32) -> (i32, i32) {
    %c0_i32 = arith.constant 0 : i32
    %c0_i32_0 = arith.constant 0 : i32
    %c0_i32_1 = arith.constant 0 : i32
    return %c0_i32, %c0_i32_0 : i32, i32
  }
  func.func @transform_10(%arg0: i32) -> (i32, i32) {
    %c0_i32 = arith.constant 0 : i32
    %c0_i32_0 = arith.constant 0 : i32
    %c0_i32_1 = arith.constant 0 : i32
    return %c0_i32, %c0_i32_0 : i32, i32
  }
  func.func @transform_11(%arg0: i32) -> (i32, i32) {
    %c0_i32 = arith.constant 0 : i32
    %c0_i32_0 = arith.constant 0 : i32
    %c0_i32_1 = arith.constant 0 : i32
    return %c0_i32, %c0_i32_0 : i32, i32
  }
  func.func @transform_12(%arg0: i32) -> (i32, i32) {
    %c0_i32 = arith.constant 0 : i32
    %c0_i32_0 = arith.constant 0 : i32
    %c0_i32_1 = arith.constant 0 : i32
    return %c0_i32, %c0_i32_0 : i32, i32
  }
  func.func @transform_13(%arg0: i32) -> (i32, i32) {
    %c0_i32 = arith.constant 0 : i32
    %c0_i32_0 = arith.constant 0 : i32
    %c0_i32_1 = arith.constant 0 : i32
    return %c0_i32, %c0_i32_0 : i32, i32
  }
  func.func @transform_14(%arg0: i32) -> (i32, i32) {
    %c0_i32 = arith.constant 0 : i32
    %c0_i32_0 = arith.constant 0 : i32
    return %arg0, %c0_i32 : i32, i32
  }
}

</mosaic_0001>

<llo_original>
// kernel: tpu_custom_call.1
$region0: #{tpu_custom_call.1}
  #allocation0 [shape = 'u32[]', space=smem, size = 0x4, offset = 0x4, fixed_abs, tag = 'smem constant byte address 0x4 - core index']
  #allocation1 [shape = 'u32[144,128]{1,0:T(1,128)}', space=vmem, size = 0x12000, scoped, tag = 'internal scratch']
  %s0 = inlined_call_operand.hbm [shape: bf16[32,16], index: 0, kind: input, shape index: {}]
  %s1 = inlined_call_operand.hbm [shape: f32[8,128], index: 1, kind: input, shape index: {}]
  %s2 = inlined_call_operand.hbm [shape: bf16[4,8,16], index: 2, kind: input, shape index: {}]
  %s3 = inlined_call_operand.hbm [shape: bf16[16,128], index: 3, kind: input, shape index: {}]
  %s4 = inlined_call_operand.hbm [shape: f32[1,128], index: 4, kind: input, shape index: {}]
  %s5 = inlined_call_operand.hbm [shape: bf16[128,128], index: 5, kind: input, shape index: {}]
  %s6 = inlined_call_operand.hbm [shape: f32[1,128], index: 6, kind: input, shape index: {}]
  %s7 = inlined_call_operand.hbm [shape: bf16[16,128], index: 7, kind: input, shape index: {}]
  %s8 = inlined_call_operand.hbm [shape: f32[1,128], index: 8, kind: input, shape index: {}]
  %s9 = inlined_call_operand.hbm [shape: bf16[128,128], index: 9, kind: input, shape index: {}]
  %s10 = inlined_call_operand.hbm [shape: bf16[128,128], index: 10, kind: input, shape index: {}]
  %s11 = inlined_call_operand.hbm [shape: f32[1,128], index: 11, kind: input, shape index: {}]
  %s12 = inlined_call_operand.hbm [shape: bf16[128,128], index: 12, kind: input, shape index: {}]
  %s13 = inlined_call_operand.hbm [shape: f32[1,128], index: 13, kind: input, shape index: {}]
  %s14 = inlined_call_operand.hbm [shape: f32[32,128], index: 14, kind: output, shape index: {}]
  %s15 = sld [smem:[#allocation0]]
  $region145: #{tpu_custom_call.1} parent=0
    _
  %s17 = ssub.s32 1, %s15
  %s18 = scalar_select 0, %s17, %s15
  $region1: #{tpu_custom_call.1} parent=0
    #allocation2 [shape = 'u8[8192]{0}', space=vmem, size = 0x2000, scoped, tag = 'input window, operand 0']
    #allocation3 [shape = 's32[2]{0}', space=sflag, size = 0x8, scoped, tag = 'scoped memory for tpu_custom_call.1']
    #allocation4 [shape = 's32[2]{0}', space=sflag, size = 0x8, scoped, tag = 'scoped memory for tpu_custom_call.1']
    #allocation5 [shape = 'u8[4096]{0}', space=vmem, size = 0x1000, scoped, tag = 'input window, operand 1, single buffered']
    #allocation6 [shape = 's32[1]{0}', space=sflag, size = 0x4, scoped, tag = 'scoped memory for tpu_custom_call.1']
    #allocation7 [shape = 'u8[8192]{0}', space=vmem, size = 0x2000, scoped, tag = 'input window, operand 2, single buffered']
    #allocation8 [shape = 'u8[4096]{0}', space=vmem, size = 0x1000, scoped, tag = 'input window, operand 3, single buffered']
    #allocation9 [shape = 's32[1]{0}', space=sflag, size = 0x4, scoped, tag = 'scoped memory for tpu_custom_call.1']
    #allocation10 [shape = 'u8[512]{0}', space=vmem, size = 0x400, scoped, tag = 'input window, operand 4, single buffered']
    #allocation11 [shape = 'u8[32768]{0}', space=vmem, size = 0x8000, scoped, tag = 'input window, operand 5, single buffered']
    #allocation12 [shape = 's32[1]{0}', space=sflag, size = 0x4, scoped, tag = 'scoped memory for tpu_custom_call.1']
    #allocation13 [shape = 'u8[512]{0}', space=vmem, size = 0x400, scoped, tag = 'input window, operand 6, single buffered']
    #allocation14 [shape = 'u8[4096]{0}', space=vmem, size = 0x1000, scoped, tag = 'input window, operand 7, single buffered']
    #allocation15 [shape = 's32[1]{0}', space=sflag, size = 0x4, scoped, tag = 'scoped memory for tpu_custom_call.1']
    #allocation16 [shape = 'u8[512]{0}', space=vmem, size = 0x400, scoped, tag = 'input window, operand 8, single buffered']
    #allocation17 [shape = 'u8[32768]{0}', space=vmem, size = 0x8000, scoped, tag = 'input window, operand 9, single buffered']
    #allocation18 [shape = 's32[1]{0}', space=sflag, size = 0x4, scoped, tag = 'scoped memory for tpu_custom_call.1']
    #allocation19 [shape = 'u8[32768]{0}', space=vmem, size = 0x8000, scoped, tag = 'input window, operand 10, single buffered']
    #allocation20 [shape = 'u8[512]{0}', space=vmem, size = 0x400, scoped, tag = 'input window, operand 11, single buffered']
    #allocation21 [shape = 's32[1]{0}', space=sflag, size = 0x4, scoped, tag = 'scoped memory for tpu_custom_call.1']
    #allocation22 [shape = 'u8[32768]{0}', space=vmem, size = 0x8000, scoped, tag = 'input window, operand 12, single buffered']
    #allocation23 [shape = 'u8[512]{0}', space=vmem, size = 0x400, scoped, tag = 'input window, operand 13, single buffered']
    #allocation24 [shape = 's32[1]{0}', space=sflag, size = 0x4, scoped, tag = 'scoped memory for tpu_custom_call.1']
    #allocation25 [shape = 'u8[16384]{0}', space=vmem, size = 0x4000, scoped, tag = 'output window, operand 0']
    %19 = vsyncpa [#allocation3], 0
    %s20 = scalar_lea.sflag [#allocation3], 1
    %21 = vsyncpa %s20, 0
    %22 = vsyncpa [#allocation6], 0
    %23 = vsyncpa [#allocation9], 0
    %24 = vsyncpa [#allocation12], 0
    %25 = vsyncpa [#allocation15], 0
    %26 = vsyncpa [#allocation18], 0
    %27 = vsyncpa [#allocation21], 0
    %28 = vsyncpa [#allocation24], 0
    %29 = vsyncpa [#allocation4], 0
    %s30 = scalar_lea.sflag [#allocation4], 1
    %31 = vsyncpa %s30, 0
    loop: start=0, step=1, limit=4
    $region2: #{tpu_custom_call.1} parent=1 // loop_pre_header
      _
    $region3: #{tpu_custom_call.1} parent=1 // loop_header
      %s33 = sphi 0, %s37
      %p34 = scmp.ge.s32.totalorder %s33, 4
      %s43 = sphi 0, %s45
      %s46 = sphi 0, %s43
      %s47 = sphi 0, %s46
      %s63 = sphi 0, %s47
      %s67 = sphi 0, %s67
      %s69 = sphi 0, %s67
      %s70 = sphi 0, %s69
      %s84 = sphi 0, %s70
      %s88 = sphi 0, %s88
      %s90 = sphi 0, %s88
      %s91 = sphi 0, %s90
      %s105 = sphi 0, %s91
      %s109 = sphi 0, %s109
      %s111 = sphi 0, %s109
      %s112 = sphi 0, %s111
      %s126 = sphi 0, %s112
      %s130 = sphi 0, %s130
      %s132 = sphi 0, %s130
      %s133 = sphi 0, %s132
      %s147 = sphi 0, %s133
      %s151 = sphi 0, %s151
      %s153 = sphi 0, %s151
      %s154 = sphi 0, %s153
      %s168 = sphi 0, %s154
      %s172 = sphi 0, %s172
      %s174 = sphi 0, %s172
      %s175 = sphi 0, %s174
      %s189 = sphi 0, %s175
      %s193 = sphi 0, %s193
      %s195 = sphi 0, %s193
      %s196 = sphi 0, %s195
      %s210 = sphi 0, %s196
      %s214 = sphi 0, %s214
      %s216 = sphi 0, %s214
      %s217 = sphi 0, %s216
      %s231 = sphi 0, %s217
      %s235 = sphi 0, %s235
      %s237 = sphi 0, %s235
      %s238 = sphi 0, %s237
      %s252 = sphi 0, %s238
      %s256 = sphi 0, %s256
      %s258 = sphi 0, %s256
      %s259 = sphi 0, %s258
      %s273 = sphi 0, %s259
      %s277 = sphi 0, %s277
      %s279 = sphi 0, %s277
      %s280 = sphi 0, %s279
      %s294 = sphi 0, %s280
      %s298 = sphi 0, %s298
      %s300 = sphi 0, %s298
      %s301 = sphi 0, %s300
      %s315 = sphi 0, %s301
      %s319 = sphi 0, %s319
      %s321 = sphi 0, %s319
      %s322 = sphi 0, %s321
      %s336 = sphi 0, %s322
      %s342 = sphi 0, %s344
      %s345 = sphi 0, %s342
      %s346 = sphi 0, %s345
      %s362 = sphi 0, %s346
    $region4: #{tpu_custom_call.1} parent=1 // loop_header_branch
      %36 = sbr.rel (%p34) target = $region8
    $region5: #{tpu_custom_call.1} parent=1 // loop_body
      %s38 = ssub.s32 %s33, 1
      %s39 = ssub.s32 %s33, 2
      %s40 = sadd.s32 %s33, 1
      %s41 = ssub.s32 %s33, %s40
      %p42 = scmp.eq.s32.totalorder %s41, 0
      %s44 = sadd.s32 %s43, 1
      %s45 = scalar_select %p42, %s43, %s44
      %p48 = pneg %p42
      %p49 = scmp.eq.s32.totalorder %s33, 1
      %p50 = por %p48, %p49
      %p51 = scmp.ne.s32.totalorder %s43, %s46
      %p52 = scmp.eq.s32.totalorder %s33, 0
      %p53 = por %p51, %p52
      %p54 = scmp.ne.s32.totalorder %s43, %s46
      %p55 = scmp.eq.s32.totalorder %s38, 1
      %p56 = por %p54, %p55
      %p57 = scmp.ne.s32.totalorder %s46, %s47
      %p58 = scmp.eq.s32.totalorder %s38, 0
      %p59 = por %p57, %p58
      %p60 = scmp.ne.s32.totalorder %s46, %s47
      %p61 = scmp.eq.s32.totalorder %s39, 1
      %p62 = por %p60, %p61
      %p64 = scmp.ne.s32.totalorder %s47, %s63
      %p65 = scmp.eq.s32.totalorder %s39, 0
      %p66 = por %p64, %p65
      %s68 = sadd.s32 %s67, 1
      %p71 = scmp.eq.s32.totalorder %s33, 1
      %p72 = scmp.ne.s32.totalorder %s67, %s69
      %p73 = scmp.eq.s32.totalorder %s33, 0
      %p74 = por %p72, %p73
      %p75 = scmp.ne.s32.totalorder %s67, %s69
      %p76 = scmp.eq.s32.totalorder %s38, 1
      %p77 = por %p75, %p76
      %p78 = scmp.ne.s32.totalorder %s69, %s70
      %p79 = scmp.eq.s32.totalorder %s38, 0
      %p80 = por %p78, %p79
      %p81 = scmp.ne.s32.totalorder %s69, %s70
      %p82 = scmp.eq.s32.totalorder %s39, 1
      %p83 = por %p81, %p82
      %p85 = scmp.ne.s32.totalorder %s70, %s84
      %p86 = scmp.eq.s32.totalorder %s39, 0
      %p87 = por %p85, %p86
      %s89 = sadd.s32 %s88, 1
      %p92 = scmp.eq.s32.totalorder %s33, 1
      %p93 = scmp.ne.s32.totalorder %s88, %s90
      %p94 = scmp.eq.s32.totalorder %s33, 0
      %p95 = por %p93, %p94
      %p96 = scmp.ne.s32.totalorder %s88, %s90
      %p97 = scmp.eq.s32.totalorder %s38, 1
      %p98 = por %p96, %p97
      %p99 = scmp.ne.s32.totalorder %s90, %s91
      %p100 = scmp.eq.s32.totalorder %s38, 0
      %p101 = por %p99, %p100
      %p102 = scmp.ne.s32.totalorder %s90, %s91
      %p103 = scmp.eq.s32.totalorder %s39, 1
      %p104 = por %p102, %p103
      %p106 = scmp.ne.s32.totalorder %s91, %s105
      %p107 = scmp.eq.s32.totalorder %s39, 0
      %p108 = por %p106, %p107
      %s110 = sadd.s32 %s109, 1
      %p113 = scmp.eq.s32.totalorder %s33, 1
      %p114 = scmp.ne.s32.totalorder %s109, %s111
      %p115 = scmp.eq.s32.totalorder %s33, 0
      %p116 = por %p114, %p115
      %p117 = scmp.ne.s32.totalorder %s109, %s111
      %p118 = scmp.eq.s32.totalorder %s38, 1
      %p119 = por %p117, %p118
      %p120 = scmp.ne.s32.totalorder %s111, %s112
      %p121 = scmp.eq.s32.totalorder %s38, 0
      %p122 = por %p120, %p121
      %p123 = scmp.ne.s32.totalorder %s111, %s112
      %p124 = scmp.eq.s32.totalorder %s39, 1
      %p125 = por %p123, %p124
      %p127 = scmp.ne.s32.totalorder %s112, %s126
      %p128 = scmp.eq.s32.totalorder %s39, 0
      %p129 = por %p127, %p128
      %s131 = sadd.s32 %s130, 1
      %p134 = scmp.eq.s32.totalorder %s33, 1
      %p135 = scmp.ne.s32.totalorder %s130, %s132
      %p136 = scmp.eq.s32.totalorder %s33, 0
      %p137 = por %p135, %p136
      %p138 = scmp.ne.s32.totalorder %s130, %s132
      %p139 = scmp.eq.s32.totalorder %s38, 1
      %p140 = por %p138, %p139
      %p141 = scmp.ne.s32.totalorder %s132, %s133
      %p142 = scmp.eq.s32.totalorder %s38, 0
      %p143 = por %p141, %p142
      %p144 = scmp.ne.s32.totalorder %s132, %s133
      %p145 = scmp.eq.s32.totalorder %s39, 1
      %p146 = por %p144, %p145
      %p148 = scmp.ne.s32.totalorder %s133, %s147
      %p149 = scmp.eq.s32.totalorder %s39, 0
      %p150 = por %p148, %p149
      %s152 = sadd.s32 %s151, 1
      %p155 = scmp.eq.s32.totalorder %s33, 1
      %p156 = scmp.ne.s32.totalorder %s151, %s153
      %p157 = scmp.eq.s32.totalorder %s33, 0
      %p158 = por %p156, %p157
      %p159 = scmp.ne.s32.totalorder %s151, %s153
      %p160 = scmp.eq.s32.totalorder %s38, 1
      %p161 = por %p159, %p160
      %p162 = scmp.ne.s32.totalorder %s153, %s154
      %p163 = scmp.eq.s32.totalorder %s38, 0
      %p164 = por %p162, %p163
      %p165 = scmp.ne.s32.totalorder %s153, %s154
      %p166 = scmp.eq.s32.totalorder %s39, 1
      %p167 = por %p165, %p166
      %p169 = scmp.ne.s32.totalorder %s154, %s168
      %p170 = scmp.eq.s32.totalorder %s39, 0
      %p171 = por %p169, %p170
      %s173 = sadd.s32 %s172, 1
      %p176 = scmp.eq.s32.totalorder %s33, 1
      %p177 = scmp.ne.s32.totalorder %s172, %s174
      %p178 = scmp.eq.s32.totalorder %s33, 0
      %p179 = por %p177, %p178
      %p180 = scmp.ne.s32.totalorder %s172, %s174
      %p181 = scmp.eq.s32.totalorder %s38, 1
      %p182 = por %p180, %p181
      %p183 = scmp.ne.s32.totalorder %s174, %s175
      %p184 = scmp.eq.s32.totalorder %s38, 0
      %p185 = por %p183, %p184
      %p186 = scmp.ne.s32.totalorder %s174, %s175
      %p187 = scmp.eq.s32.totalorder %s39, 1
      %p188 = por %p186, %p187
      %p190 = scmp.ne.s32.totalorder %s175, %s189
      %p191 = scmp.eq.s32.totalorder %s39, 0
      %p192 = por %p190, %p191
      %s194 = sadd.s32 %s193, 1
      %p197 = scmp.eq.s32.totalorder %s33, 1
      %p198 = scmp.ne.s32.totalorder %s193, %s195
      %p199 = scmp.eq.s32.totalorder %s33, 0
      %p200 = por %p198, %p199
      %p201 = scmp.ne.s32.totalorder %s193, %s195
      %p202 = scmp.eq.s32.totalorder %s38, 1
      %p203 = por %p201, %p202
      %p204 = scmp.ne.s32.totalorder %s195, %s196
      %p205 = scmp.eq.s32.totalorder %s38, 0
      %p206 = por %p204, %p205
      %p207 = scmp.ne.s32.totalorder %s195, %s196
      %p208 = scmp.eq.s32.totalorder %s39, 1
      %p209 = por %p207, %p208
      %p211 = scmp.ne.s32.totalorder %s196, %s210
      %p212 = scmp.eq.s32.totalorder %s39, 0
      %p213 = por %p211, %p212
      %s215 = sadd.s32 %s214, 1
      %p218 = scmp.eq.s32.totalorder %s33, 1
      %p219 = scmp.ne.s32.totalorder %s214, %s216
      %p220 = scmp.eq.s32.totalorder %s33, 0
      %p221 = por %p219, %p220
      %p222 = scmp.ne.s32.totalorder %s214, %s216
      %p223 = scmp.eq.s32.totalorder %s38, 1
      %p224 = por %p222, %p223
      %p225 = scmp.ne.s32.totalorder %s216, %s217
      %p226 = scmp.eq.s32.totalorder %s38, 0
      %p227 = por %p225, %p226
      %p228 = scmp.ne.s32.totalorder %s216, %s217
      %p229 = scmp.eq.s32.totalorder %s39, 1
      %p230 = por %p228, %p229
      %p232 = scmp.ne.s32.totalorder %s217, %s231
      %p233 = scmp.eq.s32.totalorder %s39, 0
      %p234 = por %p232, %p233
      %s236 = sadd.s32 %s235, 1
      %p239 = scmp.eq.s32.totalorder %s33, 1
      %p240 = scmp.ne.s32.totalorder %s235, %s237
      %p241 = scmp.eq.s32.totalorder %s33, 0
      %p242 = por %p240, %p241
      %p243 = scmp.ne.s32.totalorder %s235, %s237
      %p244 = scmp.eq.s32.totalorder %s38, 1
      %p245 = por %p243, %p244
      %p246 = scmp.ne.s32.totalorder %s237, %s238
      %p247 = scmp.eq.s32.totalorder %s38, 0
      %p248 = por %p246, %p247
      %p249 = scmp.ne.s32.totalorder %s237, %s238
      %p250 = scmp.eq.s32.totalorder %s39, 1
      %p251 = por %p249, %p250
      %p253 = scmp.ne.s32.totalorder %s238, %s252
      %p254 = scmp.eq.s32.totalorder %s39, 0
      %p255 = por %p253, %p254
      %s257 = sadd.s32 %s256, 1
      %p260 = scmp.eq.s32.totalorder %s33, 1
      %p261 = scmp.ne.s32.totalorder %s256, %s258
      %p262 = scmp.eq.s32.totalorder %s33, 0
      %p263 = por %p261, %p262
      %p264 = scmp.ne.s32.totalorder %s256, %s258
      %p265 = scmp.eq.s32.totalorder %s38, 1
      %p266 = por %p264, %p265
      %p267 = scmp.ne.s32.totalorder %s258, %s259
      %p268 = scmp.eq.s32.totalorder %s38, 0
      %p269 = por %p267, %p268
      %p270 = scmp.ne.s32.totalorder %s258, %s259
      %p271 = scmp.eq.s32.totalorder %s39, 1
      %p272 = por %p270, %p271
      %p274 = scmp.ne.s32.totalorder %s259, %s273
      %p275 = scmp.eq.s32.totalorder %s39, 0
      %p276 = por %p274, %p275
      %s278 = sadd.s32 %s277, 1
      %p281 = scmp.eq.s32.totalorder %s33, 1
      %p282 = scmp.ne.s32.totalorder %s277, %s279
      %p283 = scmp.eq.s32.totalorder %s33, 0
      %p284 = por %p282, %p283
      %p285 = scmp.ne.s32.totalorder %s277, %s279
      %p286 = scmp.eq.s32.totalorder %s38, 1
      %p287 = por %p285, %p286
      %p288 = scmp.ne.s32.totalorder %s279, %s280
      %p289 = scmp.eq.s32.totalorder %s38, 0
      %p290 = por %p288, %p289
      %p291 = scmp.ne.s32.totalorder %s279, %s280
      %p292 = scmp.eq.s32.totalorder %s39, 1
      %p293 = por %p291, %p292
      %p295 = scmp.ne.s32.totalorder %s280, %s294
      %p296 = scmp.eq.s32.totalorder %s39, 0
      %p297 = por %p295, %p296
      %s299 = sadd.s32 %s298, 1
      %p302 = scmp.eq.s32.totalorder %s33, 1
      %p303 = scmp.ne.s32.totalorder %s298, %s300
      %p304 = scmp.eq.s32.totalorder %s33, 0
      %p305 = por %p303, %p304
      %p306 = scmp.ne.s32.totalorder %s298, %s300
      %p307 = scmp.eq.s32.totalorder %s38, 1
      %p308 = por %p306, %p307
      %p309 = scmp.ne.s32.totalorder %s300, %s301
      %p310 = scmp.eq.s32.totalorder %s38, 0
      %p311 = por %p309, %p310
      %p312 = scmp.ne.s32.totalorder %s300, %s301
      %p313 = scmp.eq.s32.totalorder %s39, 1
      %p314 = por %p312, %p313
      %p316 = scmp.ne.s32.totalorder %s301, %s315
      %p317 = scmp.eq.s32.totalorder %s39, 0
      %p318 = por %p316, %p317
      %s320 = sadd.s32 %s319, 1
      %p323 = scmp.eq.s32.totalorder %s33, 1
      %p324 = scmp.ne.s32.totalorder %s319, %s321
      %p325 = scmp.eq.s32.totalorder %s33, 0
      %p326 = por %p324, %p325
      %p327 = scmp.ne.s32.totalorder %s319, %s321
      %p328 = scmp.eq.s32.totalorder %s38, 1
      %p329 = por %p327, %p328
      %p330 = scmp.ne.s32.totalorder %s321, %s322
      %p331 = scmp.eq.s32.totalorder %s38, 0
      %p332 = por %p330, %p331
      %p333 = scmp.ne.s32.totalorder %s321, %s322
      %p334 = scmp.eq.s32.totalorder %s39, 1
      %p335 = por %p333, %p334
      %p337 = scmp.ne.s32.totalorder %s322, %s336
      %p338 = scmp.eq.s32.totalorder %s39, 0
      %p339 = por %p337, %p338
      %s340 = ssub.s32 %s33, %s40
      %p341 = scmp.eq.s32.totalorder %s340, 0
      %s343 = sadd.s32 %s342, 1
      %s344 = scalar_select %p341, %s342, %s343
      %p347 = pneg %p341
      %p348 = scmp.eq.s32.totalorder %s33, 1
      %p349 = por %p347, %p348
      %p350 = scmp.ne.s32.totalorder %s342, %s345
      %p351 = scmp.eq.s32.totalorder %s33, 0
      %p352 = por %p350, %p351
      %p353 = scmp.ne.s32.totalorder %s342, %s345
      %p354 = scmp.eq.s32.totalorder %s38, 1
      %p355 = por %p353, %p354
      %p356 = scmp.ne.s32.totalorder %s345, %s346
      %p357 = scmp.eq.s32.totalorder %s38, 0
      %p358 = por %p356, %p357
      %p359 = scmp.ne.s32.totalorder %s345, %s346
      %p360 = scmp.eq.s32.totalorder %s39, 1
      %p361 = por %p359, %p360
      %p363 = scmp.ne.s32.totalorder %s346, %s362
      %p364 = scmp.eq.s32.totalorder %s39, 0
      %p365 = por %p363, %p364
      %p366 = scmp.le.s32.totalorder 1, %s33
      %p367 = scmp.lt.s32.totalorder %s33, 3
      %p368 = pnand %p366, %p367
      %p369 = pneg %p368
      // Predicated region
      $region9: #{tpu_custom_call.1} parent=5 // pred_check
        _
      $region10: #{tpu_custom_call.1} parent=5 // pred_check_branch
        %371 = sbr.rel (%p368) target = $region12
      $region11: #{tpu_custom_call.1} parent=5 // pred_region
        %s372 = ssub.s32 %s33, 1
        // Predicated region
        $region13: #{tpu_custom_call.1} parent=11 // pred_check
          %p373 = pneg %p80
        $region14: #{tpu_custom_call.1} parent=11 // pred_check_branch
          %375 = sbr.rel (%p373) target = $region16
        $region15: #{tpu_custom_call.1} parent=11 // pred_region
          %s377 = ssub.s32 128, 128
          %378 = vsyncadd [#allocation6], %s377
          %s380 = sshll.u32 [#allocation5], 4
          %s381 = int_to_ptr.vmem [resolvable:$true] %s380
          %383 = dma.hbm_to_vmem [thread:$0]  %s1, 128, %s381, [#allocation6]
        $region16: #{tpu_custom_call.1} parent=11 // pred_fallthru
          _
        // Predicated region
        $region17: #{tpu_custom_call.1} parent=11 // pred_check
          %p384 = pneg %p101
        $region18: #{tpu_custom_call.1} parent=11 // pred_check_branch
          %386 = sbr.rel (%p384) target = $region20
        $region19: #{tpu_custom_call.1} parent=11 // pred_region
          %s388 = ssub.s32 256, 256
          %389 = vsyncadd [#allocation6], %s388
          %s390 = sshll.u32 [#allocation7], 4
          %s391 = int_to_ptr.vmem [resolvable:$true] %s390
          %396 = dma.hbm_to_vmem [thread:$0]  %s2, 256, %s391, [#allocation6], 64, 64, 4
        $region20: #{tpu_custom_call.1} parent=11 // pred_fallthru
          _
        // Predicated region
        $region21: #{tpu_custom_call.1} parent=11 // pred_check
          %p397 = pneg %p122
        $region22: #{tpu_custom_call.1} parent=11 // pred_check_branch
          %399 = sbr.rel (%p397) target = $region24
        $region23: #{tpu_custom_call.1} parent=11 // pred_region
          %s401 = ssub.s32 128, 128
          %402 = vsyncadd [#allocation9], %s401
          %s403 = sshll.u32 [#allocation8], 4
          %s404 = int_to_ptr.vmem [resolvable:$true] %s403
          %409 = dma.hbm_to_vmem [thread:$0]  %s3, 128, %s404, [#allocation9], 64, 64, 4
        $region24: #{tpu_custom_call.1} parent=11 // pred_fallthru
          _
        // Predicated region
        $region25: #{tpu_custom_call.1} parent=11 // pred_check
          %p410 = pneg %p143
        $region26: #{tpu_custom_call.1} parent=11 // pred_check_branch
          %412 = sbr.rel (%p410) target = $region28
        $region27: #{tpu_custom_call.1} parent=11 // pred_region
          %s414 = ssub.s32 16, 16
          %415 = vsyncadd [#allocation9], %s414
          %s417 = sshll.u32 [#allocation10], 4
          %s418 = int_to_ptr.vmem [resolvable:$true] %s417
          %420 = dma.hbm_to_vmem [thread:$0]  %s4, 16, %s418, [#allocation9]
        $region28: #{tpu_custom_call.1} parent=11 // pred_fallthru
          _
        // Predicated region
        $region29: #{tpu_custom_call.1} parent=11 // pred_check
          %p421 = pneg %p164
        $region30: #{tpu_custom_call.1} parent=11 // pred_check_branch
          %423 = sbr.rel (%p421) target = $region32
        $region31: #{tpu_custom_call.1} parent=11 // pred_region
          %s425 = ssub.s32 1024, 1024
          %426 = vsyncadd [#allocation12], %s425
          %s427 = sshll.u32 [#allocation11], 4
          %s428 = int_to_ptr.vmem [resolvable:$true] %s427
          %433 = dma.hbm_to_vmem [thread:$0]  %s5, 1024, %s428, [#allocation12], 64, 64, 4
        $region32: #{tpu_custom_call.1} parent=11 // pred_fallthru
          _
        // Predicated region
        $region33: #{tpu_custom_call.1} parent=11 // pred_check
          %p434 = pneg %p185
        $region34: #{tpu_custom_call.1} parent=11 // pred_check_branch
          %436 = sbr.rel (%p434) target = $region36
        $region35: #{tpu_custom_call.1} parent=11 // pred_region
          %s438 = ssub.s32 16, 16
          %439 = vsyncadd [#allocation12], %s438
          %s441 = sshll.u32 [#allocation13], 4
          %s442 = int_to_ptr.vmem [resolvable:$true] %s441
          %444 = dma.hbm_to_vmem [thread:$0]  %s6, 16, %s442, [#allocation12]
        $region36: #{tpu_custom_call.1} parent=11 // pred_fallthru
          _
        // Predicated region
        $region37: #{tpu_custom_call.1} parent=11 // pred_check
          %p445 = pneg %p206
        $region38: #{tpu_custom_call.1} parent=11 // pred_check_branch
          %447 = sbr.rel (%p445) target = $region40
        $region39: #{tpu_custom_call.1} parent=11 // pred_region
          %s449 = ssub.s32 128, 128
          %450 = vsyncadd [#allocation15], %s449
          %s451 = sshll.u32 [#allocation14], 4
          %s452 = int_to_ptr.vmem [resolvable:$true] %s451
          %457 = dma.hbm_to_vmem [thread:$0]  %s7, 128, %s452, [#allocation15], 64, 64, 4
        $region40: #{tpu_custom_call.1} parent=11 // pred_fallthru
          _
        // Predicated region
        $region41: #{tpu_custom_call.1} parent=11 // pred_check
          %p458 = pneg %p227
        $region42: #{tpu_custom_call.1} parent=11 // pred_check_branch
          %460 = sbr.rel (%p458) target = $region44
        $region43: #{tpu_custom_call.1} parent=11 // pred_region
          %s462 = ssub.s32 16, 16
          %463 = vsyncadd [#allocation15], %s462
          %s465 = sshll.u32 [#allocation16], 4
          %s466 = int_to_ptr.vmem [resolvable:$true] %s465
          %468 = dma.hbm_to_vmem [thread:$0]  %s8, 16, %s466, [#allocation15]
        $region44: #{tpu_custom_call.1} parent=11 // pred_fallthru
          _
        // Predicated region
        $region45: #{tpu_custom_call.1} parent=11 // pred_check
          %p469 = pneg %p248
        $region46: #{tpu_custom_call.1} parent=11 // pred_check_branch
          %471 = sbr.rel (%p469) target = $region48
        $region47: #{tpu_custom_call.1} parent=11 // pred_region
          %s473 = ssub.s32 1024, 1024
          %474 = vsyncadd [#allocation18], %s473
          %s475 = sshll.u32 [#allocation17], 4
          %s476 = int_to_ptr.vmem [resolvable:$true] %s475
          %481 = dma.hbm_to_vmem [thread:$0]  %s9, 1024, %s476, [#allocation18], 64, 64, 4
        $region48: #{tpu_custom_call.1} parent=11 // pred_fallthru
          _
        // Predicated region
        $region49: #{tpu_custom_call.1} parent=11 // pred_check
          %p482 = pneg %p269
        $region50: #{tpu_custom_call.1} parent=11 // pred_check_branch
          %484 = sbr.rel (%p482) target = $region52
        $region51: #{tpu_custom_call.1} parent=11 // pred_region
          %s486 = ssub.s32 1024, 1024
          %487 = vsyncadd [#allocation18], %s486
          %s488 = sshll.u32 [#allocation19], 4
          %s489 = int_to_ptr.vmem [resolvable:$true] %s488
          %494 = dma.hbm_to_vmem [thread:$0]  %s10, 1024, %s489, [#allocation18], 64, 64, 4
        $region52: #{tpu_custom_call.1} parent=11 // pred_fallthru
          _
        // Predicated region
        $region53: #{tpu_custom_call.1} parent=11 // pred_check
          %p495 = pneg %p290
        $region54: #{tpu_custom_call.1} parent=11 // pred_check_branch
          %497 = sbr.rel (%p495) target = $region56
        $region55: #{tpu_custom_call.1} parent=11 // pred_region
          %s499 = ssub.s32 16, 16
          %500 = vsyncadd [#allocation21], %s499
          %s502 = sshll.u32 [#allocation20], 4
          %s503 = int_to_ptr.vmem [resolvable:$true] %s502
          %505 = dma.hbm_to_vmem [thread:$0]  %s11, 16, %s503, [#allocation21]
        $region56: #{tpu_custom_call.1} parent=11 // pred_fallthru
          _
        // Predicated region
        $region57: #{tpu_custom_call.1} parent=11 // pred_check
          %p506 = pneg %p311
        $region58: #{tpu_custom_call.1} parent=11 // pred_check_branch
          %508 = sbr.rel (%p506) target = $region60
        $region59: #{tpu_custom_call.1} parent=11 // pred_region
          %s510 = ssub.s32 1024, 1024
          %511 = vsyncadd [#allocation21], %s510
          %s512 = sshll.u32 [#allocation22], 4
          %s513 = int_to_ptr.vmem [resolvable:$true] %s512
          %518 = dma.hbm_to_vmem [thread:$0]  %s12, 1024, %s513, [#allocation21], 64, 64, 4
        $region60: #{tpu_custom_call.1} parent=11 // pred_fallthru
          _
        // Predicated region
        $region61: #{tpu_custom_call.1} parent=11 // pred_check
          %p519 = pneg %p332
        $region62: #{tpu_custom_call.1} parent=11 // pred_check_branch
          %521 = sbr.rel (%p519) target = $region64
        $region63: #{tpu_custom_call.1} parent=11 // pred_region
          %s523 = ssub.s32 16, 16
          %524 = vsyncadd [#allocation24], %s523
          %s526 = sshll.u32 [#allocation23], 4
          %s527 = int_to_ptr.vmem [resolvable:$true] %s526
          %529 = dma.hbm_to_vmem [thread:$0]  %s13, 16, %s527, [#allocation24]
        $region64: #{tpu_custom_call.1} parent=11 // pred_fallthru
          _
      $region12: #{tpu_custom_call.1} parent=5 // pred_fallthru
        _
      %p530 = scmp.lt.s32.totalorder %s33, 2
      // Predicated region
      $region65: #{tpu_custom_call.1} parent=5 // pred_check
        %p531 = pneg %p530
      $region66: #{tpu_custom_call.1} parent=5 // pred_check_branch
        %533 = sbr.rel (%p531) target = $region68
      $region67: #{tpu_custom_call.1} parent=5 // pred_region
        // Predicated region
        $region69: #{tpu_custom_call.1} parent=67 // pred_check
          %p534 = pneg %p53
        $region70: #{tpu_custom_call.1} parent=67 // pred_check_branch
          %536 = sbr.rel (%p534) target = $region72
        $region71: #{tpu_custom_call.1} parent=67 // pred_region
          %s537 = sand.u32 %s43, 1
          %s538 = scalar_lea.sflag [#allocation3], %s537
          %s539 = sand.u32 %s43, 1
          %s540 = smul.addr %s539, 8
          %s541 = scalar_lea.vmem [#allocation2], %s540
          %s542 = smul.u32 2, %s33
          %s544 = ssub.s32 128, 128
          %545 = vsyncadd %s538, %s544
          %s546 = smul.addr %s542, 64
          %s547 = scalar_lea.hbm %s0, %s546
          %s548 = sshll.u32 %s541, 4
          %s549 = int_to_ptr.vmem [resolvable:$true] %s548
          %554 = dma.hbm_to_vmem [thread:$0]  %s547, 128, %s549, %s538, 64, 64, 4
        $region72: #{tpu_custom_call.1} parent=67 // pred_fallthru
          _
      $region68: #{tpu_custom_call.1} parent=5 // pred_fallthru
        _
      %p555 = scmp.le.s32.totalorder 1, %s33
      %p556 = scmp.lt.s32.totalorder %s33, 3
      %p557 = pnand %p555, %p556
      %p558 = pneg %p557
      // Predicated region
      $region73: #{tpu_custom_call.1} parent=5 // pred_check
        _
      $region74: #{tpu_custom_call.1} parent=5 // pred_check_branch
        %560 = sbr.rel (%p557) target = $region76
      $region75: #{tpu_custom_call.1} parent=5 // pred_region
        %s561 = ssub.s32 %s33, 1
        %s562 = sand.u32 %s46, 1
        %s563 = scalar_lea.sflag [#allocation3], %s562
        %s564 = sand.u32 %s46, 1
        %s565 = smul.addr %s564, 8
        %s566 = scalar_lea.vmem [#allocation2], %s565
        // Predicated region
        $region77: #{tpu_custom_call.1} parent=75 // pred_check
          %p567 = pneg %p59
        $region78: #{tpu_custom_call.1} parent=75 // pred_check_branch
          %569 = sbr.rel (%p567) target = $region80
        $region79: #{tpu_custom_call.1} parent=75 // pred_region
          %570 = dma.done %s563, 128
        $region80: #{tpu_custom_call.1} parent=75 // pred_fallthru
          _
        // Predicated region
        $region81: #{tpu_custom_call.1} parent=75 // pred_check
          %p571 = pneg %p80
        $region82: #{tpu_custom_call.1} parent=75 // pred_check_branch
          %573 = sbr.rel (%p571) target = $region84
        $region83: #{tpu_custom_call.1} parent=75 // pred_region
          %574 = dma.done [#allocation6], 128
        $region84: #{tpu_custom_call.1} parent=75 // pred_fallthru
          _
        // Predicated region
        $region85: #{tpu_custom_call.1} parent=75 // pred_check
          %p575 = pneg %p101
        $region86: #{tpu_custom_call.1} parent=75 // pred_check_branch
          %577 = sbr.rel (%p575) target = $region88
        $region87: #{tpu_custom_call.1} parent=75 // pred_region
          %578 = dma.done [#allocation6], 256
        $region88: #{tpu_custom_call.1} parent=75 // pred_fallthru
          _
        // Predicated region
        $region89: #{tpu_custom_call.1} parent=75 // pred_check
          %p579 = pneg %p122
        $region90: #{tpu_custom_call.1} parent=75 // pred_check_branch
          %581 = sbr.rel (%p579) target = $region92
        $region91: #{tpu_custom_call.1} parent=75 // pred_region
          %582 = dma.done [#allocation9], 128
        $region92: #{tpu_custom_call.1} parent=75 // pred_fallthru
          _
        // Predicated region
        $region93: #{tpu_custom_call.1} parent=75 // pred_check
          %p583 = pneg %p143
        $region94: #{tpu_custom_call.1} parent=75 // pred_check_branch
          %585 = sbr.rel (%p583) target = $region96
        $region95: #{tpu_custom_call.1} parent=75 // pred_region
          %586 = dma.done [#allocation9], 16
        $region96: #{tpu_custom_call.1} parent=75 // pred_fallthru
          _
        // Predicated region
        $region97: #{tpu_custom_call.1} parent=75 // pred_check
          %p587 = pneg %p164
        $region98: #{tpu_custom_call.1} parent=75 // pred_check_branch
          %589 = sbr.rel (%p587) target = $region100
        $region99: #{tpu_custom_call.1} parent=75 // pred_region
          %590 = dma.done [#allocation12], 1024
        $region100: #{tpu_custom_call.1} parent=75 // pred_fallthru
          _
        // Predicated region
        $region101: #{tpu_custom_call.1} parent=75 // pred_check
          %p591 = pneg %p185
        $region102: #{tpu_custom_call.1} parent=75 // pred_check_branch
          %593 = sbr.rel (%p591) target = $region104
        $region103: #{tpu_custom_call.1} parent=75 // pred_region
          %594 = dma.done [#allocation12], 16
        $region104: #{tpu_custom_call.1} parent=75 // pred_fallthru
          _
        // Predicated region
        $region105: #{tpu_custom_call.1} parent=75 // pred_check
          %p595 = pneg %p206
        $region106: #{tpu_custom_call.1} parent=75 // pred_check_branch
          %597 = sbr.rel (%p595) target = $region108
        $region107: #{tpu_custom_call.1} parent=75 // pred_region
          %598 = dma.done [#allocation15], 128
        $region108: #{tpu_custom_call.1} parent=75 // pred_fallthru
          _
        // Predicated region
        $region109: #{tpu_custom_call.1} parent=75 // pred_check
          %p599 = pneg %p227
        $region110: #{tpu_custom_call.1} parent=75 // pred_check_branch
          %601 = sbr.rel (%p599) target = $region112
        $region111: #{tpu_custom_call.1} parent=75 // pred_region
          %602 = dma.done [#allocation15], 16
        $region112: #{tpu_custom_call.1} parent=75 // pred_fallthru
          _
        // Predicated region
        $region113: #{tpu_custom_call.1} parent=75 // pred_check
          %p603 = pneg %p248
        $region114: #{tpu_custom_call.1} parent=75 // pred_check_branch
          %605 = sbr.rel (%p603) target = $region116
        $region115: #{tpu_custom_call.1} parent=75 // pred_region
          %606 = dma.done [#allocation18], 1024
        $region116: #{tpu_custom_call.1} parent=75 // pred_fallthru
          _
        // Predicated region
        $region117: #{tpu_custom_call.1} parent=75 // pred_check
          %p607 = pneg %p269
        $region118: #{tpu_custom_call.1} parent=75 // pred_check_branch
          %609 = sbr.rel (%p607) target = $region120
        $region119: #{tpu_custom_call.1} parent=75 // pred_region
          %610 = dma.done [#allocation18], 1024
        $region120: #{tpu_custom_call.1} parent=75 // pred_fallthru
          _
        // Predicated region
        $region121: #{tpu_custom_call.1} parent=75 // pred_check
          %p611 = pneg %p290
        $region122: #{tpu_custom_call.1} parent=75 // pred_check_branch
          %613 = sbr.rel (%p611) target = $region124
        $region123: #{tpu_custom_call.1} parent=75 // pred_region
          %614 = dma.done [#allocation21], 16
        $region124: #{tpu_custom_call.1} parent=75 // pred_fallthru
          _
        // Predicated region
        $region125: #{tpu_custom_call.1} parent=75 // pred_check
          %p615 = pneg %p311
        $region126: #{tpu_custom_call.1} parent=75 // pred_check_branch
          %617 = sbr.rel (%p615) target = $region128
        $region127: #{tpu_custom_call.1} parent=75 // pred_region
          %618 = dma.done [#allocation21], 1024
        $region128: #{tpu_custom_call.1} parent=75 // pred_fallthru
          _
        // Predicated region
        $region129: #{tpu_custom_call.1} parent=75 // pred_check
          %p619 = pneg %p332
        $region130: #{tpu_custom_call.1} parent=75 // pred_check_branch
          %621 = sbr.rel (%p619) target = $region132
        $region131: #{tpu_custom_call.1} parent=75 // pred_region
          %622 = dma.done [#allocation24], 16
        $region132: #{tpu_custom_call.1} parent=75 // pred_fallthru
          _
        %s623 = sand.u32 %s46, 1
        %s624 = scalar_lea.sflag [#allocation3], %s623
        %s625 = sand.u32 %s46, 1
        %s626 = smul.addr %s625, 8
        %s627 = scalar_lea.vmem [#allocation2], %s626
        %p628 = pneg %p59
        %p629 = pneg %p56
        %p630 = pneg %p80
        %p631 = pneg %p77
        %p632 = pneg %p101
        %p633 = pneg %p98
        %p634 = pneg %p122
        %p635 = pneg %p119
        %p636 = pneg %p143
        %p637 = pneg %p140
        %p638 = pneg %p164
        %p639 = pneg %p161
        %p640 = pneg %p185
        %p641 = pneg %p182
        %p642 = pneg %p206
        %p643 = pneg %p203
        %p644 = pneg %p227
        %p645 = pneg %p224
        %p646 = pneg %p248
        %p647 = pneg %p245
        %p648 = pneg %p269
        %p649 = pneg %p266
        %p650 = pneg %p290
        %p651 = pneg %p287
        %p652 = pneg %p311
        %p653 = pneg %p308
        %p654 = pneg %p332
        %p655 = pneg %p329
        %p656 = pneg %p358
        %p657 = pneg %p355
        %s658 = sand.u32 %s345, 1
        %s659 = scalar_lea.sflag [#allocation4], %s658
        %s660 = sand.u32 %s345, 1
        %s661 = smul.addr %s660, 16
        %s662 = scalar_lea.vmem [#allocation25], %s661
        %s663 = smul.u32 2, %s38
        %s664 = smul.u32 2, %s38
        %v666 = vld [vmem:[%s566] sm:$0xf]
        %v667 = vld [vmem:[%s566 + $0x4] sm:$0xf]
        %v668 = vld [vmem:[#allocation8] sm:$0xf]
        %v669 = vld [vmem:[#allocation8 + $0x4] sm:$0xf]
        %v670 = vld [vmem:[#allocation10] sm:$0x1]
        %v672 = vlaneseq
        %v673 = vshrl.u32 %v672, 7
        %v674 = vsub.s32 0, %v673
        %v675 = vrot.slane %v670, %v674
        %v679 = vunpack.c.l.b16 %v666
        %v680 = vunpack.c.l.b16 %v667
        %v681 = vpack.c.b16 %v680, %v679
        %v684 = vunpack.c.l.b16 %v668
        %v685 = vunpack.c.l.b16 %v669
        %v686 = vpack.c.b16 %v685, %v684
        %vm688 = vcmask 130048
        %v690 = vsel %vm688, %v681, 0
        %692 = vmatprep.subr.bf16.mxu0 0
        %693 = vmatpush1.bf16.msra.mxu0 %v686
        %694 = vmatprep.subr.bf16.mxu0 0
        %695 = vmatpush1.bf16.msra.mxu0 0
        %696 = vmatprep.subr.bf16.mxu0 0
        %697 = vmatpush1.bf16.msra.mxu0 0
        %698 = vmatprep.subr.bf16.mxu0 0
        %699 = vmatpush1.bf16.msra.mxu0 0
        %700 = vmatprep.subr.bf16.mxu0 0
        %701 = vmatpush1.bf16.msra.mxu0 0
        %702 = vmatprep.subr.bf16.mxu0 0
        %703 = vmatpush1.bf16.msra.mxu0 0
        %704 = vmatprep.subr.bf16.mxu0 0
        %705 = vmatpush1.bf16.msra.mxu0 0
        %706 = vmatprep.subr.bf16.mxu0 0
        %707 = vmatpush1.bf16.msra.mxu0 0
        %708 = vmatprep.subr.bf16.mxu0 0
        %709 = vmatpush1.bf16.msra.mxu0 0
        %710 = vmatprep.subr.bf16.mxu0 0
        %711 = vmatpush1.bf16.msra.mxu0 0
        %712 = vmatprep.subr.bf16.mxu0 0
        %713 = vmatpush1.bf16.msra.mxu0 0
        %714 = vmatprep.subr.bf16.mxu0 0
        %715 = vmatpush1.bf16.msra.mxu0 0
        %716 = vmatprep.subr.bf16.mxu0 0
        %717 = vmatpush1.bf16.msra.mxu0 0
        %718 = vmatprep.subr.bf16.mxu0 0
        %719 = vmatpush1.bf16.msra.mxu0 0
        %720 = vmatprep.subr.bf16.mxu0 0
        %721 = vmatpush1.bf16.msra.mxu0 0
        %722 = vmatprep.subr.bf16.mxu0 0
        %723 = vmatpush1.bf16.msra.mxu0 0
        %724 = vmatprep.mubr.bf16.mxu0 0
        %725 = vmatmul.mubr.bf16.gmra.mrb[0].mxu0 %v690
        %v726 = vpop.f32.mrb[0].mxu0
        %v727 = vadd.f32 %v675, %v726
        %v728 = vpop.f32.mrb[0].mxu0
        %v729 = vpop.f32.mrb[0].mxu0
        %v730 = vadd.f32 %v675, %v729
        %v731 = vpop.f32.mrb[0].mxu0
        %732 = vdwg.mxu0
        %v733 = vpack.c.bf16 %v730, %v727
        %v734 = vld [vmem:[#allocation5] sm:$0xff]
        %v735 = vld [vmem:[#allocation7] sm:$0xf]
        %v737 = vsel %vm688, %v735, 0
        %739 = vmatprep.subr.bf16.mxu0 0
        %740 = vmatpush1.bf16.xpose.msra.mxu0 %v690
        %741 = vmatprep.subr.bf16.mxu0 0
        %742 = vmatpush1.bf16.xpose.msra.mxu0 0
        %743 = vmatprep.subr.bf16.mxu0 0
        %744 = vmatpush1.bf16.xpose.msra.mxu0 0
        %745 = vmatprep.subr.bf16.mxu0 0
        %746 = vmatpush1.bf16.xpose.msra.mxu0 0
        %747 = vmatprep.subr.bf16.mxu0 0
        %748 = vmatpush1.bf16.xpose.msra.mxu0 0
        %749 = vmatprep.subr.bf16.mxu0 0
        %750 = vmatpush1.bf16.xpose.msra.mxu0 0
        %751 = vmatprep.subr.bf16.mxu0 0
        %752 = vmatpush1.bf16.xpose.msra.mxu0 0
        %753 = vmatprep.subr.bf16.mxu0 0
        %754 = vmatpush1.bf16.xpose.msra.mxu0 0
        %755 = vmatprep.subr.bf16.mxu0 0
        %756 = vmatpush1.bf16.xpose.msra.mxu0 0
        %757 = vmatprep.subr.bf16.mxu0 0
        %758 = vmatpush1.bf16.xpose.msra.mxu0 0
        %759 = vmatprep.subr.bf16.mxu0 0
        %760 = vmatpush1.bf16.xpose.msra.mxu0 0
        %761 = vmatprep.subr.bf16.mxu0 0
        %762 = vmatpush1.bf16.xpose.msra.mxu0 0
        %763 = vmatprep.subr.bf16.mxu0 0
        %764 = vmatpush1.bf16.xpose.msra.mxu0 0
        %765 = vmatprep.subr.bf16.mxu0 0
        %766 = vmatpush1.bf16.xpose.msra.mxu0 0
        %767 = vmatprep.subr.bf16.mxu0 0
        %768 = vmatpush1.bf16.xpose.msra.mxu0 0
        %769 = vmatprep.subr.bf16.mxu0 0
        %770 = vmatpush1.bf16.xpose.msra.mxu0 0
        %771 = vmatprep.mubr.bf16.mxu0 0
        %772 = vmatmul.mubr.bf16.gmra.mrb[0].mxu0 %v737
        %v773 = vpop.f32.mrb[0].mxu0
        %v774 = vadd.f32 0.0, %v773
        %v775 = vpop.f32.mrb[0].mxu0
        %v776 = vpop.f32.mrb[0].mxu0
        %v777 = vpop.f32.mrb[0].mxu0
        %778 = vdwg.mxu0
        %v779 = vsel %vm688, %v774, -inf
        %780 = vmax.xlane.f32.xlu0 %v779
        %v781 = vpop.xlane.xlu0 %780
        %v782 = vsub.f32 %v774, %v781
        %v783 = vmul.f32 %v782, 1.442695
        %v784 = vpow.pop %v783
        %v785 = vsel %vm688, %v784, 0.0
        %786 = vadd.xlane.f32.xlu0 %v785
        %v787 = vpop.xlane.xlu0 %786
        %v788 = vrcp.pop %v787
        %v789 = vmul.f32 %v784, %v788
        %v790 = vpack.c.bf16 %v789, %v789
        %v792 = vsel %vm688, %v790, 0
        %794 = vmatprep.subr.bf16.mxu0 0
        %795 = vmatpush1.bf16.msra.mxu0 %v733
        %796 = vmatprep.subr.bf16.mxu0 0
        %797 = vmatpush1.bf16.msra.mxu0 0
        %798 = vmatprep.subr.bf16.mxu0 0
        %799 = vmatpush1.bf16.msra.mxu0 0
        %800 = vmatprep.subr.bf16.mxu0 0
        %801 = vmatpush1.bf16.msra.mxu0 0
        %802 = vmatprep.subr.bf16.mxu0 0
        %803 = vmatpush1.bf16.msra.mxu0 0
        %804 = vmatprep.subr.bf16.mxu0 0
        %805 = vmatpush1.bf16.msra.mxu0 0
        %806 = vmatprep.subr.bf16.mxu0 0
        %807 = vmatpush1.bf16.msra.mxu0 0
        %808 = vmatprep.subr.bf16.mxu0 0
        %809 = vmatpush1.bf16.msra.mxu0 0
        %810 = vmatprep.subr.bf16.mxu0 0
        %811 = vmatpush1.bf16.msra.mxu0 0
        %812 = vmatprep.subr.bf16.mxu0 0
        %813 = vmatpush1.bf16.msra.mxu0 0
        %814 = vmatprep.subr.bf16.mxu0 0
        %815 = vmatpush1.bf16.msra.mxu0 0
        %816 = vmatprep.subr.bf16.mxu0 0
        %817 = vmatpush1.bf16.msra.mxu0 0
        %818 = vmatprep.subr.bf16.mxu0 0
        %819 = vmatpush1.bf16.msra.mxu0 0
        %820 = vmatprep.subr.bf16.mxu0 0
        %821 = vmatpush1.bf16.msra.mxu0 0
        %822 = vmatprep.subr.bf16.mxu0 0
        %823 = vmatpush1.bf16.msra.mxu0 0
        %824 = vmatprep.subr.bf16.mxu0 0
        %825 = vmatpush1.bf16.msra.mxu0 0
        %826 = vmatprep.mubr.bf16.mxu0 0
        %827 = vmatmul.mubr.bf16.gmra.mrb[0].mxu0 %v792
        %v828 = vpop.f32.mrb[0].mxu0
        %v829 = vadd.f32 0.0, %v828
        %v830 = vpop.f32.mrb[0].mxu0
        %v831 = vpop.f32.mrb[0].mxu0
        %v832 = vpop.f32.mrb[0].mxu0
        %833 = vdwg.mxu0
        %s834 = scalar_lea.vmem [#allocation7], 4
        %v835 = vld [vmem:[%s834] sm:$0xf]
        %v837 = vsel %vm688, %v835, 0
        %839 = vmatprep.subr.bf16.mxu0 0
        %840 = vmatpush1.bf16.xpose.msra.mxu0 %v690
        %841 = vmatprep.subr.bf16.mxu0 0
        %842 = vmatpush1.bf16.xpose.msra.mxu0 0
        %843 = vmatprep.subr.bf16.mxu0 0
        %844 = vmatpush1.bf16.xpose.msra.mxu0 0
        %845 = vmatprep.subr.bf16.mxu0 0
        %846 = vmatpush1.bf16.xpose.msra.mxu0 0
        %847 = vmatprep.subr.bf16.mxu0 0
        %848 = vmatpush1.bf16.xpose.msra.mxu0 0
        %849 = vmatprep.subr.bf16.mxu0 0
        %850 = vmatpush1.bf16.xpose.msra.mxu0 0
        %851 = vmatprep.subr.bf16.mxu0 0
        %852 = vmatpush1.bf16.xpose.msra.mxu0 0
        %853 = vmatprep.subr.bf16.mxu0 0
        %854 = vmatpush1.bf16.xpose.msra.mxu0 0
        %855 = vmatprep.subr.bf16.mxu0 0
        %856 = vmatpush1.bf16.xpose.msra.mxu0 0
        %857 = vmatprep.subr.bf16.mxu0 0
        %858 = vmatpush1.bf16.xpose.msra.mxu0 0
        %859 = vmatprep.subr.bf16.mxu0 0
        %860 = vmatpush1.bf16.xpose.msra.mxu0 0
        %861 = vmatprep.subr.bf16.mxu0 0
        %862 = vmatpush1.bf16.xpose.msra.mxu0 0
        %863 = vmatprep.subr.bf16.mxu0 0
        %864 = vmatpush1.bf16.xpose.msra.mxu0 0
        %865 = vmatprep.subr.bf16.mxu0 0
        %866 = vmatpush1.bf16.xpose.msra.mxu0 0
        %867 = vmatprep.subr.bf16.mxu0 0
        %868 = vmatpush1.bf16.xpose.msra.mxu0 0
        %869 = vmatprep.subr.bf16.mxu0 0
        %870 = vmatpush1.bf16.xpose.msra.mxu0 0
        %871 = vmatprep.mubr.bf16.mxu0 0
        %872 = vmatmul.mubr.bf16.gmra.mrb[0].mxu0 %v837
        %v873 = vpop.f32.mrb[0].mxu0
        %v874 = vadd.f32 0.0, %v873
        %v875 = vpop.f32.mrb[0].mxu0
        %v876 = vpop.f32.mrb[0].mxu0
        %v877 = vpop.f32.mrb[0].mxu0
        %878 = vdwg.mxu0
        %v879 = vsel %vm688, %v874, -inf
        %880 = vmax.xlane.f32.xlu0 %v879
        %v881 = vpop.xlane.xlu0 %880
        %v882 = vsub.f32 %v874, %v881
        %v883 = vmul.f32 %v882, 1.442695
        %v884 = vpow.pop %v883
        %v885 = vsel %vm688, %v884, 0.0
        %886 = vadd.xlane.f32.xlu0 %v885
        %v887 = vpop.xlane.xlu0 %886
        %v888 = vrcp.pop %v887
        %v889 = vmul.f32 %v884, %v888
        %v890 = vpack.c.bf16 %v889, %v889
        %892 = vrot.lane.b32.xlu0 %v733, 120
        %v893 = vpop.permute.xlu0 %892
        %v896 = vsel %vm688, %v890, 0
        %898 = vmatprep.subr.bf16.mxu0 0
        %899 = vmatpush1.bf16.msra.mxu0 %v893
        %900 = vmatprep.subr.bf16.mxu0 0
        %901 = vmatpush1.bf16.msra.mxu0 0
        %902 = vmatprep.subr.bf16.mxu0 0
        %903 = vmatpush1.bf16.msra.mxu0 0
        %904 = vmatprep.subr.bf16.mxu0 0
        %905 = vmatpush1.bf16.msra.mxu0 0
        %906 = vmatprep.subr.bf16.mxu0 0
        %907 = vmatpush1.bf16.msra.mxu0 0
        %908 = vmatprep.subr.bf16.mxu0 0
        %909 = vmatpush1.bf16.msra.mxu0 0
        %910 = vmatprep.subr.bf16.mxu0 0
        %911 = vmatpush1.bf16.msra.mxu0 0
        %912 = vmatprep.subr.bf16.mxu0 0
        %913 = vmatpush1.bf16.msra.mxu0 0
        %914 = vmatprep.subr.bf16.mxu0 0
        %915 = vmatpush1.bf16.msra.mxu0 0
        %916 = vmatprep.subr.bf16.mxu0 0
        %917 = vmatpush1.bf16.msra.mxu0 0
        %918 = vmatprep.subr.bf16.mxu0 0
        %919 = vmatpush1.bf16.msra.mxu0 0
        %920 = vmatprep.subr.bf16.mxu0 0
        %921 = vmatpush1.bf16.msra.mxu0 0
        %922 = vmatprep.subr.bf16.mxu0 0
        %923 = vmatpush1.bf16.msra.mxu0 0
        %924 = vmatprep.subr.bf16.mxu0 0
        %925 = vmatpush1.bf16.msra.mxu0 0
        %926 = vmatprep.subr.bf16.mxu0 0
        %927 = vmatpush1.bf16.msra.mxu0 0
        %928 = vmatprep.subr.bf16.mxu0 0
        %929 = vmatpush1.bf16.msra.mxu0 0
        %930 = vmatprep.mubr.bf16.mxu0 0
        %931 = vmatmul.mubr.bf16.gmra.mrb[0].mxu0 %v896
        %v932 = vpop.f32.mrb[0].mxu0
        %v933 = vadd.f32 0.0, %v932
        %v934 = vpop.f32.mrb[0].mxu0
        %v935 = vpop.f32.mrb[0].mxu0
        %v936 = vpop.f32.mrb[0].mxu0
        %937 = vdwg.mxu0
        %s938 = scalar_lea.vmem [#allocation7], 8
        %v939 = vld [vmem:[%s938] sm:$0xf]
        %v941 = vsel %vm688, %v939, 0
        %943 = vmatprep.subr.bf16.mxu0 0
        %944 = vmatpush1.bf16.xpose.msra.mxu0 %v690
        %945 = vmatprep.subr.bf16.mxu0 0
        %946 = vmatpush1.bf16.xpose.msra.mxu0 0
        %947 = vmatprep.subr.bf16.mxu0 0
        %948 = vmatpush1.bf16.xpose.msra.mxu0 0
        %949 = vmatprep.subr.bf16.mxu0 0
        %950 = vmatpush1.bf16.xpose.msra.mxu0 0
        %951 = vmatprep.subr.bf16.mxu0 0
        %952 = vmatpush1.bf16.xpose.msra.mxu0 0
        %953 = vmatprep.subr.bf16.mxu0 0
        %954 = vmatpush1.bf16.xpose.msra.mxu0 0
        %955 = vmatprep.subr.bf16.mxu0 0
        %956 = vmatpush1.bf16.xpose.msra.mxu0 0
        %957 = vmatprep.subr.bf16.mxu0 0
        %958 = vmatpush1.bf16.xpose.msra.mxu0 0
        %959 = vmatprep.subr.bf16.mxu0 0
        %960 = vmatpush1.bf16.xpose.msra.mxu0 0
        %961 = vmatprep.subr.bf16.mxu0 0
        %962 = vmatpush1.bf16.xpose.msra.mxu0 0
        %963 = vmatprep.subr.bf16.mxu0 0
        %964 = vmatpush1.bf16.xpose.msra.mxu0 0
        %965 = vmatprep.subr.bf16.mxu0 0
        %966 = vmatpush1.bf16.xpose.msra.mxu0 0
        %967 = vmatprep.subr.bf16.mxu0 0
        %968 = vmatpush1.bf16.xpose.msra.mxu0 0
        %969 = vmatprep.subr.bf16.mxu0 0
        %970 = vmatpush1.bf16.xpose.msra.mxu0 0
        %971 = vmatprep.subr.bf16.mxu0 0
        %972 = vmatpush1.bf16.xpose.msra.mxu0 0
        %973 = vmatprep.subr.bf16.mxu0 0
        %974 = vmatpush1.bf16.xpose.msra.mxu0 0
        %975 = vmatprep.mubr.bf16.mxu0 0
        %976 = vmatmul.mubr.bf16.gmra.mrb[0].mxu0 %v941
        %v977 = vpop.f32.mrb[0].mxu0
        %v978 = vadd.f32 0.0, %v977
        %v979 = vpop.f32.mrb[0].mxu0
        %v980 = vpop.f32.mrb[0].mxu0
        %v981 = vpop.f32.mrb[0].mxu0
        %982 = vdwg.mxu0
        %v983 = vsel %vm688, %v978, -inf
        %984 = vmax.xlane.f32.xlu0 %v983
        %v985 = vpop.xlane.xlu0 %984
        %v986 = vsub.f32 %v978, %v985
        %v987 = vmul.f32 %v986, 1.442695
        %v988 = vpow.pop %v987
        %v989 = vsel %vm688, %v988, 0.0
        %990 = vadd.xlane.f32.xlu0 %v989
        %v991 = vpop.xlane.xlu0 %990
        %v992 = vrcp.pop %v991
        %v993 = vmul.f32 %v988, %v992
        %v994 = vpack.c.bf16 %v993, %v993
        %995 = vrot.lane.b32.xlu0 %v733, 112
        %v996 = vpop.permute.xlu0 %995
        %v999 = vsel %vm688, %v994, 0
        %1001 = vmatprep.subr.bf16.mxu0 0
        %1002 = vmatpush1.bf16.msra.mxu0 %v996
        %1003 = vmatprep.subr.bf16.mxu0 0
        %1004 = vmatpush1.bf16.msra.mxu0 0
        %1005 = vmatprep.subr.bf16.mxu0 0
        %1006 = vmatpush1.bf16.msra.mxu0 0
        %1007 = vmatprep.subr.bf16.mxu0 0
        %1008 = vmatpush1.bf16.msra.mxu0 0
        %1009 = vmatprep.subr.bf16.mxu0 0
        %1010 = vmatpush1.bf16.msra.mxu0 0
        %1011 = vmatprep.subr.bf16.mxu0 0
        %1012 = vmatpush1.bf16.msra.mxu0 0
        %1013 = vmatprep.subr.bf16.mxu0 0
        %1014 = vmatpush1.bf16.msra.mxu0 0
        %1015 = vmatprep.subr.bf16.mxu0 0
        %1016 = vmatpush1.bf16.msra.mxu0 0
        %1017 = vmatprep.subr.bf16.mxu0 0
        %1018 = vmatpush1.bf16.msra.mxu0 0
        %1019 = vmatprep.subr.bf16.mxu0 0
        %1020 = vmatpush1.bf16.msra.mxu0 0
        %1021 = vmatprep.subr.bf16.mxu0 0
        %1022 = vmatpush1.bf16.msra.mxu0 0
        %1023 = vmatprep.subr.bf16.mxu0 0
        %1024 = vmatpush1.bf16.msra.mxu0 0
        %1025 = vmatprep.subr.bf16.mxu0 0
        %1026 = vmatpush1.bf16.msra.mxu0 0
        %1027 = vmatprep.subr.bf16.mxu0 0
        %1028 = vmatpush1.bf16.msra.mxu0 0
        %1029 = vmatprep.subr.bf16.mxu0 0
        %1030 = vmatpush1.bf16.msra.mxu0 0
        %1031 = vmatprep.subr.bf16.mxu0 0
        %1032 = vmatpush1.bf16.msra.mxu0 0
        %1033 = vmatprep.mubr.bf16.mxu0 0
        %1034 = vmatmul.mubr.bf16.gmra.mrb[0].mxu0 %v999
        %v1035 = vpop.f32.mrb[0].mxu0
        %v1036 = vadd.f32 0.0, %v1035
        %v1037 = vpop.f32.mrb[0].mxu0
        %v1038 = vpop.f32.mrb[0].mxu0
        %v1039 = vpop.f32.mrb[0].mxu0
        %1040 = vdwg.mxu0
        %s1041 = scalar_lea.vmem [#allocation7], 12
        %v1042 = vld [vmem:[%s1041] sm:$0xf]
        %v1044 = vsel %vm688, %v1042, 0
        %1046 = vmatprep.subr.bf16.mxu0 0
        %1047 = vmatpush1.bf16.xpose.msra.mxu0 %v690
        %1048 = vmatprep.subr.bf16.mxu0 0
        %1049 = vmatpush1.bf16.xpose.msra.mxu0 0
        %1050 = vmatprep.subr.bf16.mxu0 0
        %1051 = vmatpush1.bf16.xpose.msra.mxu0 0
        %1052 = vmatprep.subr.bf16.mxu0 0
        %1053 = vmatpush1.bf16.xpose.msra.mxu0 0
        %1054 = vmatprep.subr.bf16.mxu0 0
        %1055 = vmatpush1.bf16.xpose.msra.mxu0 0
        %1056 = vmatprep.subr.bf16.mxu0 0
        %1057 = vmatpush1.bf16.xpose.msra.mxu0 0
        %1058 = vmatprep.subr.bf16.mxu0 0
        %1059 = vmatpush1.bf16.xpose.msra.mxu0 0
        %1060 = vmatprep.subr.bf16.mxu0 0
        %1061 = vmatpush1.bf16.xpose.msra.mxu0 0
        %1062 = vmatprep.subr.bf16.mxu0 0
        %1063 = vmatpush1.bf16.xpose.msra.mxu0 0
        %1064 = vmatprep.subr.bf16.mxu0 0
        %1065 = vmatpush1.bf16.xpose.msra.mxu0 0
        %1066 = vmatprep.subr.bf16.mxu0 0
        %1067 = vmatpush1.bf16.xpose.msra.mxu0 0
        %1068 = vmatprep.subr.bf16.mxu0 0
        %1069 = vmatpush1.bf16.xpose.msra.mxu0 0
        %1070 = vmatprep.subr.bf16.mxu0 0
        %1071 = vmatpush1.bf16.xpose.msra.mxu0 0
        %1072 = vmatprep.subr.bf16.mxu0 0
        %1073 = vmatpush1.bf16.xpose.msra.mxu0 0
        %1074 = vmatprep.subr.bf16.mxu0 0
        %1075 = vmatpush1.bf16.xpose.msra.mxu0 0
        %1076 = vmatprep.subr.bf16.mxu0 0
        %1077 = vmatpush1.bf16.xpose.msra.mxu0 0
        %1078 = vmatprep.mubr.bf16.mxu0 0
        %1079 = vmatmul.mubr.bf16.gmra.mrb[0].mxu0 %v1044
        %v1080 = vpop.f32.mrb[0].mxu0
        %v1081 = vadd.f32 0.0, %v1080
        %v1082 = vpop.f32.mrb[0].mxu0
        %v1083 = vpop.f32.mrb[0].mxu0
        %v1084 = vpop.f32.mrb[0].mxu0
        %1085 = vdwg.mxu0
        %v1086 = vsel %vm688, %v1081, -inf
        %1087 = vmax.xlane.f32.xlu0 %v1086
        %v1088 = vpop.xlane.xlu0 %1087
        %v1089 = vsub.f32 %v1081, %v1088
        %v1090 = vmul.f32 %v1089, 1.442695
        %v1091 = vpow.pop %v1090
        %v1092 = vsel %vm688, %v1091, 0.0
        %1093 = vadd.xlane.f32.xlu0 %v1092
        %v1094 = vpop.xlane.xlu0 %1093
        %v1095 = vrcp.pop %v1094
        %v1096 = vmul.f32 %v1091, %v1095
        %v1097 = vpack.c.bf16 %v1096, %v1096
        %1098 = vrot.lane.b32.xlu0 %v733, 104
        %v1099 = vpop.permute.xlu0 %1098
        %v1102 = vsel %vm688, %v1097, 0
        %1104 = vmatprep.subr.bf16.mxu0 0
        %1105 = vmatpush1.bf16.msra.mxu0 %v1099
        %1106 = vmatprep.subr.bf16.mxu0 0
        %1107 = vmatpush1.bf16.msra.mxu0 0
        %1108 = vmatprep.subr.bf16.mxu0 0
        %1109 = vmatpush1.bf16.msra.mxu0 0
        %1110 = vmatprep.subr.bf16.mxu0 0
        %1111 = vmatpush1.bf16.msra.mxu0 0
        %1112 = vmatprep.subr.bf16.mxu0 0
        %1113 = vmatpush1.bf16.msra.mxu0 0
        %1114 = vmatprep.subr.bf16.mxu0 0
        %1115 = vmatpush1.bf16.msra.mxu0 0
        %1116 = vmatprep.subr.bf16.mxu0 0
        %1117 = vmatpush1.bf16.msra.mxu0 0
        %1118 = vmatprep.subr.bf16.mxu0 0
        %1119 = vmatpush1.bf16.msra.mxu0 0
        %1120 = vmatprep.subr.bf16.mxu0 0
        %1121 = vmatpush1.bf16.msra.mxu0 0
        %1122 = vmatprep.subr.bf16.mxu0 0
        %1123 = vmatpush1.bf16.msra.mxu0 0
        %1124 = vmatprep.subr.bf16.mxu0 0
        %1125 = vmatpush1.bf16.msra.mxu0 0
        %1126 = vmatprep.subr.bf16.mxu0 0
        %1127 = vmatpush1.bf16.msra.mxu0 0
        %1128 = vmatprep.subr.bf16.mxu0 0
        %1129 = vmatpush1.bf16.msra.mxu0 0
        %1130 = vmatprep.subr.bf16.mxu0 0
        %1131 = vmatpush1.bf16.msra.mxu0 0
        %1132 = vmatprep.subr.bf16.mxu0 0
        %1133 = vmatpush1.bf16.msra.mxu0 0
        %1134 = vmatprep.subr.bf16.mxu0 0
        %1135 = vmatpush1.bf16.msra.mxu0 0
        %1136 = vmatprep.mubr.bf16.mxu0 0
        %1137 = vmatmul.mubr.bf16.gmra.mrb[0].mxu0 %v1102
        %v1138 = vpop.f32.mrb[0].mxu0
        %v1139 = vadd.f32 0.0, %v1138
        %v1140 = vpop.f32.mrb[0].mxu0
        %v1141 = vpop.f32.mrb[0].mxu0
        %v1142 = vpop.f32.mrb[0].mxu0
        %1143 = vdwg.mxu0
        %1145 = vrot.lane.b32.xlu0 %v933, 8
        %v1146 = vpop.permute.xlu0 %1145
        %1149 = vrot.lane.b32.xlu0 %v1036, 16
        %v1150 = vpop.permute.xlu0 %1149
        %1153 = vrot.lane.b32.xlu0 %v1139, 24
        %v1154 = vpop.permute.xlu0 %1153
        %vm1156 = vcmask 64512
        %v1157 = vsel %vm1156, %v829, %v1146
        %v1158 = vsel %vm688, %v1157, %v1150
        %vm1159 = vcmask 195584
        %v1160 = vsel %vm1159, %v1158, %v1154
        %vm1161 = vcmask 261120
        %v1162 = vsel %vm1161, %v1160, 0.0
        %v1163 = vadd.f32 %v734, %v1162
        %v1164 = vpack.c.bf16 %v1163, %v1163
        %v1165 = vld [vmem:[#allocation11] sm:$0xf]
        %v1166 = vld [vmem:[#allocation11 + $0x4] sm:$0xf]
        %v1167 = vld [vmem:[#allocation11 + $0x8] sm:$0xf]
        %v1168 = vld [vmem:[#allocation11 + $0xc] sm:$0xf]
        %v1169 = vld [vmem:[#allocation11 + $0x10] sm:$0xf]
        %v1170 = vld [vmem:[#allocation11 + $0x14] sm:$0xf]
        %v1171 = vld [vmem:[#allocation11 + $0x18] sm:$0xf]
        %v1172 = vld [vmem:[#allocation11 + $0x1c] sm:$0xf]
        %v1173 = vld [vmem:[#allocation11 + $0x20] sm:$0xf]
        %v1174 = vld [vmem:[#allocation11 + $0x24] sm:$0xf]
        %v1175 = vld [vmem:[#allocation11 + $0x28] sm:$0xf]
        %v1176 = vld [vmem:[#allocation11 + $0x2c] sm:$0xf]
        %v1177 = vld [vmem:[#allocation11 + $0x30] sm:$0xf]
        %v1178 = vld [vmem:[#allocation11 + $0x34] sm:$0xf]
        %v1179 = vld [vmem:[#allocation11 + $0x38] sm:$0xf]
        %v1180 = vld [vmem:[#allocation11 + $0x3c] sm:$0xf]
        %v1181 = vld [vmem:[#allocation13] sm:$0x1]
        %v1183 = vlaneseq
        %v1184 = vshrl.u32 %v1183, 7
        %v1185 = vsub.s32 0, %v1184
        %v1186 = vrot.slane %v1181, %v1185
        %v1204 = vunpack.c.l.b16 %v1165
        %v1205 = vunpack.c.l.b16 %v1166
        %v1206 = vunpack.c.l.b16 %v1167
        %v1207 = vunpack.c.l.b16 %v1168
        %v1208 = vunpack.c.l.b16 %v1169
        %v1209 = vunpack.c.l.b16 %v1170
        %v1210 = vunpack.c.l.b16 %v1171
        %v1211 = vunpack.c.l.b16 %v1172
        %v1212 = vunpack.c.l.b16 %v1173
        %v1213 = vunpack.c.l.b16 %v1174
        %v1214 = vunpack.c.l.b16 %v1175
        %v1215 = vunpack.c.l.b16 %v1176
        %v1216 = vunpack.c.l.b16 %v1177
        %v1217 = vunpack.c.l.b16 %v1178
        %v1218 = vunpack.c.l.b16 %v1179
        %v1219 = vunpack.c.l.b16 %v1180
        %v1220 = vpack.c.b16 %v1205, %v1204
        %v1221 = vpack.c.b16 %v1207, %v1206
        %v1222 = vpack.c.b16 %v1209, %v1208
        %v1223 = vpack.c.b16 %v1211, %v1210
        %v1224 = vpack.c.b16 %v1213, %v1212
        %v1225 = vpack.c.b16 %v1215, %v1214
        %v1226 = vpack.c.b16 %v1217, %v1216
        %v1227 = vpack.c.b16 %v1219, %v1218
        %1236 = vmatprep.subr.bf16.mxu0 0
        %1237 = vmatpush1.bf16.msra.mxu0 %v1220
        %1238 = vmatprep.subr.bf16.mxu0 0
        %1239 = vmatpush1.bf16.msra.mxu0 %v1221
        %1240 = vmatprep.subr.bf16.mxu0 0
        %1241 = vmatpush1.bf16.msra.mxu0 %v1222
        %1242 = vmatprep.subr.bf16.mxu0 0
        %1243 = vmatpush1.bf16.msra.mxu0 %v1223
        %1244 = vmatprep.subr.bf16.mxu0 0
        %1245 = vmatpush1.bf16.msra.mxu0 %v1224
        %1246 = vmatprep.subr.bf16.mxu0 0
        %1247 = vmatpush1.bf16.msra.mxu0 %v1225
        %1248 = vmatprep.subr.bf16.mxu0 0
        %1249 = vmatpush1.bf16.msra.mxu0 %v1226
        %1250 = vmatprep.subr.bf16.mxu0 0
        %1251 = vmatpush1.bf16.msra.mxu0 %v1227
        %1252 = vmatprep.subr.bf16.mxu0 0
        %1253 = vmatpush1.bf16.msra.mxu0 0
        %1254 = vmatprep.subr.bf16.mxu0 0
        %1255 = vmatpush1.bf16.msra.mxu0 0
        %1256 = vmatprep.subr.bf16.mxu0 0
        %1257 = vmatpush1.bf16.msra.mxu0 0
        %1258 = vmatprep.subr.bf16.mxu0 0
        %1259 = vmatpush1.bf16.msra.mxu0 0
        %1260 = vmatprep.subr.bf16.mxu0 0
        %1261 = vmatpush1.bf16.msra.mxu0 0
        %1262 = vmatprep.subr.bf16.mxu0 0
        %1263 = vmatpush1.bf16.msra.mxu0 0
        %1264 = vmatprep.subr.bf16.mxu0 0
        %1265 = vmatpush1.bf16.msra.mxu0 0
        %1266 = vmatprep.subr.bf16.mxu0 0
        %1267 = vmatpush1.bf16.msra.mxu0 0
        %1268 = vmatprep.mubr.bf16.mxu0 0
        %1269 = vmatmul.mubr.bf16.gmra.mrb[0].mxu0 %v1164
        %v1270 = vpop.f32.mrb[0].mxu0
        %v1271 = vadd.f32 %v1186, %v1270
        %v1272 = vpop.f32.mrb[0].mxu0
        %v1273 = vpop.f32.mrb[0].mxu0
        %v1274 = vpop.f32.mrb[0].mxu0
        %1275 = vdwg.mxu0
        %v1276 = vmax.f32 %v1271, 0.0
        %v1277 = vadd.f32 %v1163, %v1276
        %v1278 = vpack.c.bf16 %v1277, %v1277
        %v1279 = vld [vmem:[#allocation14] sm:$0xf]
        %v1280 = vld [vmem:[#allocation14 + $0x4] sm:$0xf]
        %v1281 = vld [vmem:[#allocation16] sm:$0x1]
        %v1283 = vlaneseq
        %v1284 = vshrl.u32 %v1283, 7
        %v1285 = vsub.s32 0, %v1284
        %v1286 = vrot.slane %v1281, %v1285
        %v1290 = vunpack.c.l.b16 %v1279
        %v1291 = vunpack.c.l.b16 %v1280
        %v1292 = vpack.c.b16 %v1291, %v1290
        %1294 = vmatprep.subr.bf16.mxu0 0
        %1295 = vmatpush1.bf16.msra.mxu0 %v1292
        %1296 = vmatprep.subr.bf16.mxu0 0
        %1297 = vmatpush1.bf16.msra.mxu0 0
        %1298 = vmatprep.subr.bf16.mxu0 0
        %1299 = vmatpush1.bf16.msra.mxu0 0
        %1300 = vmatprep.subr.bf16.mxu0 0
        %1301 = vmatpush1.bf16.msra.mxu0 0
        %1302 = vmatprep.subr.bf16.mxu0 0
        %1303 = vmatpush1.bf16.msra.mxu0 0
        %1304 = vmatprep.subr.bf16.mxu0 0
        %1305 = vmatpush1.bf16.msra.mxu0 0
        %1306 = vmatprep.subr.bf16.mxu0 0
        %1307 = vmatpush1.bf16.msra.mxu0 0
        %1308 = vmatprep.subr.bf16.mxu0 0
        %1309 = vmatpush1.bf16.msra.mxu0 0
        %1310 = vmatprep.subr.bf16.mxu0 0
        %1311 = vmatpush1.bf16.msra.mxu0 0
        %1312 = vmatprep.subr.bf16.mxu0 0
        %1313 = vmatpush1.bf16.msra.mxu0 0
        %1314 = vmatprep.subr.bf16.mxu0 0
        %1315 = vmatpush1.bf16.msra.mxu0 0
        %1316 = vmatprep.subr.bf16.mxu0 0
        %1317 = vmatpush1.bf16.msra.mxu0 0
        %1318 = vmatprep.subr.bf16.mxu0 0
        %1319 = vmatpush1.bf16.msra.mxu0 0
        %1320 = vmatprep.subr.bf16.mxu0 0
        %1321 = vmatpush1.bf16.msra.mxu0 0
        %1322 = vmatprep.subr.bf16.mxu0 0
        %1323 = vmatpush1.bf16.msra.mxu0 0
        %1324 = vmatprep.subr.bf16.mxu0 0
        %1325 = vmatpush1.bf16.msra.mxu0 0
        %1326 = vmatprep.mubr.bf16.mxu0 0
        %1327 = vmatmul.mubr.bf16.gmra.mrb[0].mxu0 %v690
        %v1328 = vpop.f32.mrb[0].mxu0
        %v1329 = vadd.f32 %v1286, %v1328
        %v1330 = vpop.f32.mrb[0].mxu0
        %v1331 = vpop.f32.mrb[0].mxu0
        %v1332 = vadd.f32 %v1286, %v1331
        %v1333 = vpop.f32.mrb[0].mxu0
        %1334 = vdwg.mxu0
        %v1335 = vld [vmem:[#allocation17] sm:$0xf]
        %v1336 = vld [vmem:[#allocation17 + $0x4] sm:$0xf]
        %v1337 = vld [vmem:[#allocation17 + $0x8] sm:$0xf]
        %v1338 = vld [vmem:[#allocation17 + $0xc] sm:$0xf]
        %v1339 = vld [vmem:[#allocation17 + $0x10] sm:$0xf]
        %v1340 = vld [vmem:[#allocation17 + $0x14] sm:$0xf]
        %v1341 = vld [vmem:[#allocation17 + $0x18] sm:$0xf]
        %v1342 = vld [vmem:[#allocation17 + $0x1c] sm:$0xf]
        %v1343 = vld [vmem:[#allocation17 + $0x20] sm:$0xf]
        %v1344 = vld [vmem:[#allocation17 + $0x24] sm:$0xf]
        %v1345 = vld [vmem:[#allocation17 + $0x28] sm:$0xf]
        %v1346 = vld [vmem:[#allocation17 + $0x2c] sm:$0xf]
        %v1347 = vld [vmem:[#allocation17 + $0x30] sm:$0xf]
        %v1348 = vld [vmem:[#allocation17 + $0x34] sm:$0xf]
        %v1349 = vld [vmem:[#allocation17 + $0x38] sm:$0xf]
        %v1350 = vld [vmem:[#allocation17 + $0x3c] sm:$0xf]
        %v1367 = vunpack.c.l.b16 %v1335
        %v1368 = vunpack.c.l.b16 %v1336
        %v1369 = vunpack.c.l.b16 %v1337
        %v1370 = vunpack.c.l.b16 %v1338
        %v1371 = vunpack.c.l.b16 %v1339
        %v1372 = vunpack.c.l.b16 %v1340
        %v1373 = vunpack.c.l.b16 %v1341
        %v1374 = vunpack.c.l.b16 %v1342
        %v1375 = vunpack.c.l.b16 %v1343
        %v1376 = vunpack.c.l.b16 %v1344
        %v1377 = vunpack.c.l.b16 %v1345
        %v1378 = vunpack.c.l.b16 %v1346
        %v1379 = vunpack.c.l.b16 %v1347
        %v1380 = vunpack.c.l.b16 %v1348
        %v1381 = vunpack.c.l.b16 %v1349
        %v1382 = vunpack.c.l.b16 %v1350
        %v1383 = vpack.c.b16 %v1368, %v1367
        %v1384 = vpack.c.b16 %v1370, %v1369
        %v1385 = vpack.c.b16 %v1372, %v1371
        %v1386 = vpack.c.b16 %v1374, %v1373
        %v1387 = vpack.c.b16 %v1376, %v1375
        %v1388 = vpack.c.b16 %v1378, %v1377
        %v1389 = vpack.c.b16 %v1380, %v1379
        %v1390 = vpack.c.b16 %v1382, %v1381
        %1399 = vmatprep.subr.bf16.mxu0 0
        %1400 = vmatpush1.bf16.msra.mxu0 %v1383
        %1401 = vmatprep.subr.bf16.mxu0 0
        %1402 = vmatpush1.bf16.msra.mxu0 %v1384
        %1403 = vmatprep.subr.bf16.mxu0 0
        %1404 = vmatpush1.bf16.msra.mxu0 %v1385
        %1405 = vmatprep.subr.bf16.mxu0 0
        %1406 = vmatpush1.bf16.msra.mxu0 %v1386
        %1407 = vmatprep.subr.bf16.mxu0 0
        %1408 = vmatpush1.bf16.msra.mxu0 %v1387
        %1409 = vmatprep.subr.bf16.mxu0 0
        %1410 = vmatpush1.bf16.msra.mxu0 %v1388
        %1411 = vmatprep.subr.bf16.mxu0 0
        %1412 = vmatpush1.bf16.msra.mxu0 %v1389
        %1413 = vmatprep.subr.bf16.mxu0 0
        %1414 = vmatpush1.bf16.msra.mxu0 %v1390
        %1415 = vmatprep.subr.bf16.mxu0 0
        %1416 = vmatpush1.bf16.msra.mxu0 0
        %1417 = vmatprep.subr.bf16.mxu0 0
        %1418 = vmatpush1.bf16.msra.mxu0 0
        %1419 = vmatprep.subr.bf16.mxu0 0
        %1420 = vmatpush1.bf16.msra.mxu0 0
        %1421 = vmatprep.subr.bf16.mxu0 0
        %1422 = vmatpush1.bf16.msra.mxu0 0
        %1423 = vmatprep.subr.bf16.mxu0 0
        %1424 = vmatpush1.bf16.msra.mxu0 0
        %1425 = vmatprep.subr.bf16.mxu0 0
        %1426 = vmatpush1.bf16.msra.mxu0 0
        %1427 = vmatprep.subr.bf16.mxu0 0
        %1428 = vmatpush1.bf16.msra.mxu0 0
        %1429 = vmatprep.subr.bf16.mxu0 0
        %1430 = vmatpush1.bf16.msra.mxu0 0
        %1431 = vmatprep.mubr.bf16.mxu0 0
        %1432 = vmatmul.mubr.bf16.gmra.mrb[0].mxu0 %v1278
        %v1433 = vpop.f32.mrb[0].mxu0
        %v1434 = vadd.f32 0.0, %v1433
        %v1435 = vpop.f32.mrb[0].mxu0
        %v1436 = vpop.f32.mrb[0].mxu0
        %v1437 = vpop.f32.mrb[0].mxu0
        %1438 = vdwg.mxu0
        %v1439 = vld [vmem:[#allocation19] sm:$0xf]
        %v1440 = vld [vmem:[#allocation19 + $0x4] sm:$0xf]
        %v1441 = vld [vmem:[#allocation19 + $0x8] sm:$0xf]
        %v1442 = vld [vmem:[#allocation19 + $0xc] sm:$0xf]
        %v1443 = vld [vmem:[#allocation19 + $0x10] sm:$0xf]
        %v1444 = vld [vmem:[#allocation19 + $0x14] sm:$0xf]
        %v1445 = vld [vmem:[#allocation19 + $0x18] sm:$0xf]
        %v1446 = vld [vmem:[#allocation19 + $0x1c] sm:$0xf]
        %v1447 = vld [vmem:[#allocation19 + $0x20] sm:$0xf]
        %v1448 = vld [vmem:[#allocation19 + $0x24] sm:$0xf]
        %v1449 = vld [vmem:[#allocation19 + $0x28] sm:$0xf]
        %v1450 = vld [vmem:[#allocation19 + $0x2c] sm:$0xf]
        %v1451 = vld [vmem:[#allocation19 + $0x30] sm:$0xf]
        %v1452 = vld [vmem:[#allocation19 + $0x34] sm:$0xf]
        %v1453 = vld [vmem:[#allocation19 + $0x38] sm:$0xf]
        %v1454 = vld [vmem:[#allocation19 + $0x3c] sm:$0xf]
        %v1455 = vld [vmem:[#allocation20] sm:$0x1]
        %v1457 = vlaneseq
        %v1458 = vshrl.u32 %v1457, 7
        %v1459 = vsub.s32 0, %v1458
        %v1460 = vrot.slane %v1455, %v1459
        %v1478 = vunpack.c.l.b16 %v1439
        %v1479 = vunpack.c.l.b16 %v1440
        %v1480 = vunpack.c.l.b16 %v1441
        %v1481 = vunpack.c.l.b16 %v1442
        %v1482 = vunpack.c.l.b16 %v1443
        %v1483 = vunpack.c.l.b16 %v1444
        %v1484 = vunpack.c.l.b16 %v1445
        %v1485 = vunpack.c.l.b16 %v1446
        %v1486 = vunpack.c.l.b16 %v1447
        %v1487 = vunpack.c.l.b16 %v1448
        %v1488 = vunpack.c.l.b16 %v1449
        %v1489 = vunpack.c.l.b16 %v1450
        %v1490 = vunpack.c.l.b16 %v1451
        %v1491 = vunpack.c.l.b16 %v1452
        %v1492 = vunpack.c.l.b16 %v1453
        %v1493 = vunpack.c.l.b16 %v1454
        %v1494 = vpack.c.b16 %v1479, %v1478
        %v1495 = vpack.c.b16 %v1481, %v1480
        %v1496 = vpack.c.b16 %v1483, %v1482
        %v1497 = vpack.c.b16 %v1485, %v1484
        %v1498 = vpack.c.b16 %v1487, %v1486
        %v1499 = vpack.c.b16 %v1489, %v1488
        %v1500 = vpack.c.b16 %v1491, %v1490
        %v1501 = vpack.c.b16 %v1493, %v1492
        %1510 = vmatprep.subr.bf16.mxu0 0
        %1511 = vmatpush1.bf16.msra.mxu0 %v1494
        %1512 = vmatprep.subr.bf16.mxu0 0
        %1513 = vmatpush1.bf16.msra.mxu0 %v1495
        %1514 = vmatprep.subr.bf16.mxu0 0
        %1515 = vmatpush1.bf16.msra.mxu0 %v1496
        %1516 = vmatprep.subr.bf16.mxu0 0
        %1517 = vmatpush1.bf16.msra.mxu0 %v1497
        %1518 = vmatprep.subr.bf16.mxu0 0
        %1519 = vmatpush1.bf16.msra.mxu0 %v1498
        %1520 = vmatprep.subr.bf16.mxu0 0
        %1521 = vmatpush1.bf16.msra.mxu0 %v1499
        %1522 = vmatprep.subr.bf16.mxu0 0
        %1523 = vmatpush1.bf16.msra.mxu0 %v1500
        %1524 = vmatprep.subr.bf16.mxu0 0
        %1525 = vmatpush1.bf16.msra.mxu0 %v1501
        %1526 = vmatprep.subr.bf16.mxu0 0
        %1527 = vmatpush1.bf16.msra.mxu0 0
        %1528 = vmatprep.subr.bf16.mxu0 0
        %1529 = vmatpush1.bf16.msra.mxu0 0
        %1530 = vmatprep.subr.bf16.mxu0 0
        %1531 = vmatpush1.bf16.msra.mxu0 0
        %1532 = vmatprep.subr.bf16.mxu0 0
        %1533 = vmatpush1.bf16.msra.mxu0 0
        %1534 = vmatprep.subr.bf16.mxu0 0
        %1535 = vmatpush1.bf16.msra.mxu0 0
        %1536 = vmatprep.subr.bf16.mxu0 0
        %1537 = vmatpush1.bf16.msra.mxu0 0
        %1538 = vmatprep.subr.bf16.mxu0 0
        %1539 = vmatpush1.bf16.msra.mxu0 0
        %1540 = vmatprep.subr.bf16.mxu0 0
        %1541 = vmatpush1.bf16.msra.mxu0 0
        %1542 = vmatprep.mubr.bf16.mxu0 0
        %1543 = vmatmul.mubr.bf16.gmra.mrb[0].mxu0 %v1278
        %v1544 = vpop.f32.mrb[0].mxu0
        %v1545 = vadd.f32 %v1460, %v1544
        %v1546 = vpop.f32.mrb[0].mxu0
        %v1547 = vpop.f32.mrb[0].mxu0
        %v1548 = vpop.f32.mrb[0].mxu0
        %1549 = vdwg.mxu0
        %v1550 = vpack.c.bf16 %v1332, %v1329
        %v1551 = vpack.c.bf16 %v1434, %v1434
        %v1552 = vpack.c.bf16 %v1545, %v1545
        %v1554 = vsel %vm1156, %v1550, 0
        %v1557 = vsel %vm1156, %v1551, 0
        %1559 = vmatprep.subr.bf16.mxu0 0
        %1560 = vmatpush1.bf16.xpose.msra.mxu0 %v1557
        %1561 = vmatprep.subr.bf16.mxu0 0
        %1562 = vmatpush1.bf16.xpose.msra.mxu0 0
        %1563 = vmatprep.subr.bf16.mxu0 0
        %1564 = vmatpush1.bf16.xpose.msra.mxu0 0
        %1565 = vmatprep.subr.bf16.mxu0 0
        %1566 = vmatpush1.bf16.xpose.msra.mxu0 0
        %1567 = vmatprep.subr.bf16.mxu0 0
        %1568 = vmatpush1.bf16.xpose.msra.mxu0 0
        %1569 = vmatprep.subr.bf16.mxu0 0
        %1570 = vmatpush1.bf16.xpose.msra.mxu0 0
        %1571 = vmatprep.subr.bf16.mxu0 0
        %1572 = vmatpush1.bf16.xpose.msra.mxu0 0
        %1573 = vmatprep.subr.bf16.mxu0 0
        %1574 = vmatpush1.bf16.xpose.msra.mxu0 0
        %1575 = vmatprep.subr.bf16.mxu0 0
        %1576 = vmatpush1.bf16.xpose.msra.mxu0 0
        %1577 = vmatprep.subr.bf16.mxu0 0
        %1578 = vmatpush1.bf16.xpose.msra.mxu0 0
        %1579 = vmatprep.subr.bf16.mxu0 0
        %1580 = vmatpush1.bf16.xpose.msra.mxu0 0
        %1581 = vmatprep.subr.bf16.mxu0 0
        %1582 = vmatpush1.bf16.xpose.msra.mxu0 0
        %1583 = vmatprep.subr.bf16.mxu0 0
        %1584 = vmatpush1.bf16.xpose.msra.mxu0 0
        %1585 = vmatprep.subr.bf16.mxu0 0
        %1586 = vmatpush1.bf16.xpose.msra.mxu0 0
        %1587 = vmatprep.subr.bf16.mxu0 0
        %1588 = vmatpush1.bf16.xpose.msra.mxu0 0
        %1589 = vmatprep.subr.bf16.mxu0 0
        %1590 = vmatpush1.bf16.xpose.msra.mxu0 0
        %1591 = vmatprep.mubr.bf16.mxu0 0
        %1592 = vmatmul.mubr.bf16.gmra.mrb[0].mxu0 %v1554
        %v1593 = vpop.f32.mrb[0].mxu0
        %v1594 = vadd.f32 0.0, %v1593
        %v1595 = vpop.f32.mrb[0].mxu0
        %v1596 = vpop.f32.mrb[0].mxu0
        %v1597 = vadd.f32 0.0, %v1596
        %v1598 = vpop.f32.mrb[0].mxu0
        %1599 = vdwg.mxu0
        %v1600 = vsel %vm1156, %v1594, -inf
        %1601 = vmax.xlane.f32.xlu0 %v1600
        %v1602 = vpop.xlane.xlu0 %1601
        %v1603 = vsel %vm1156, %v1597, -inf
        %1604 = vmax.xlane.f32.xlu0 %v1603
        %v1605 = vpop.xlane.xlu0 %1604
        %v1606 = vsub.f32 %v1594, %v1602
        %v1607 = vsub.f32 %v1597, %v1605
        %v1608 = vmul.f32 %v1606, 1.442695
        %v1609 = vpow.pop %v1608
        %v1610 = vmul.f32 %v1607, 1.442695
        %v1611 = vpow.pop %v1610
        %v1612 = vsel %vm1156, %v1609, 0.0
        %1613 = vadd.xlane.f32.xlu0 %v1612
        %v1614 = vpop.xlane.xlu0 %1613
        %v1615 = vsel %vm1156, %v1611, 0.0
        %1616 = vadd.xlane.f32.xlu0 %v1615
        %v1617 = vpop.xlane.xlu0 %1616
        %v1618 = vrcp.pop %v1614
        %v1619 = vrcp.pop %v1617
        %v1620 = vmul.f32 %v1609, %v1618
        %v1621 = vmul.f32 %v1611, %v1619
        %v1622 = vpack.c.bf16 %v1621, %v1620
        %v1624 = vsel %vm1156, %v1622, 0
        %vm1626 = vcmask 1043456
        %v1628 = vsel %vm1626, %v1552, 0
        %1630 = vmatprep.subr.bf16.mxu0 0
        %1631 = vmatpush1.bf16.msra.mxu0 %v1628
        %1632 = vmatprep.subr.bf16.mxu0 0
        %1633 = vmatpush1.bf16.msra.mxu0 0
        %1634 = vmatprep.subr.bf16.mxu0 0
        %1635 = vmatpush1.bf16.msra.mxu0 0
        %1636 = vmatprep.subr.bf16.mxu0 0
        %1637 = vmatpush1.bf16.msra.mxu0 0
        %1638 = vmatprep.subr.bf16.mxu0 0
        %1639 = vmatpush1.bf16.msra.mxu0 0
        %1640 = vmatprep.subr.bf16.mxu0 0
        %1641 = vmatpush1.bf16.msra.mxu0 0
        %1642 = vmatprep.subr.bf16.mxu0 0
        %1643 = vmatpush1.bf16.msra.mxu0 0
        %1644 = vmatprep.subr.bf16.mxu0 0
        %1645 = vmatpush1.bf16.msra.mxu0 0
        %1646 = vmatprep.subr.bf16.mxu0 0
        %1647 = vmatpush1.bf16.msra.mxu0 0
        %1648 = vmatprep.subr.bf16.mxu0 0
        %1649 = vmatpush1.bf16.msra.mxu0 0
        %1650 = vmatprep.subr.bf16.mxu0 0
        %1651 = vmatpush1.bf16.msra.mxu0 0
        %1652 = vmatprep.subr.bf16.mxu0 0
        %1653 = vmatpush1.bf16.msra.mxu0 0
        %1654 = vmatprep.subr.bf16.mxu0 0
        %1655 = vmatpush1.bf16.msra.mxu0 0
        %1656 = vmatprep.subr.bf16.mxu0 0
        %1657 = vmatpush1.bf16.msra.mxu0 0
        %1658 = vmatprep.subr.bf16.mxu0 0
        %1659 = vmatpush1.bf16.msra.mxu0 0
        %1660 = vmatprep.subr.bf16.mxu0 0
        %1661 = vmatpush1.bf16.msra.mxu0 0
        %1662 = vmatprep.mubr.bf16.mxu0 0
        %1663 = vmatmul.mubr.bf16.gmra.mrb[0].mxu0 %v1624
        %v1664 = vpop.f32.mrb[0].mxu0
        %v1665 = vadd.f32 0.0, %v1664
        %v1666 = vpop.f32.mrb[0].mxu0
        %v1667 = vpop.f32.mrb[0].mxu0
        %v1668 = vadd.f32 0.0, %v1667
        %v1669 = vpop.f32.mrb[0].mxu0
        %1670 = vdwg.mxu0
        %1672 = vrot.lane.b32.xlu0 %v1550, 120
        %v1673 = vpop.permute.xlu0 %1672
        %1675 = vrot.lane.b32.xlu0 %v1551, 120
        %v1676 = vpop.permute.xlu0 %1675
        %v1678 = vsel %vm1156, %v1673, 0
        %v1681 = vsel %vm1156, %v1676, 0
        %1683 = vmatprep.subr.bf16.mxu0 0
        %1684 = vmatpush1.bf16.xpose.msra.mxu0 %v1681
        %1685 = vmatprep.subr.bf16.mxu0 0
        %1686 = vmatpush1.bf16.xpose.msra.mxu0 0
        %1687 = vmatprep.subr.bf16.mxu0 0
        %1688 = vmatpush1.bf16.xpose.msra.mxu0 0
        %1689 = vmatprep.subr.bf16.mxu0 0
        %1690 = vmatpush1.bf16.xpose.msra.mxu0 0
        %1691 = vmatprep.subr.bf16.mxu0 0
        %1692 = vmatpush1.bf16.xpose.msra.mxu0 0
        %1693 = vmatprep.subr.bf16.mxu0 0
        %1694 = vmatpush1.bf16.xpose.msra.mxu0 0
        %1695 = vmatprep.subr.bf16.mxu0 0
        %1696 = vmatpush1.bf16.xpose.msra.mxu0 0
        %1697 = vmatprep.subr.bf16.mxu0 0
        %1698 = vmatpush1.bf16.xpose.msra.mxu0 0
        %1699 = vmatprep.subr.bf16.mxu0 0
        %1700 = vmatpush1.bf16.xpose.msra.mxu0 0
        %1701 = vmatprep.subr.bf16.mxu0 0
        %1702 = vmatpush1.bf16.xpose.msra.mxu0 0
        %1703 = vmatprep.subr.bf16.mxu0 0
        %1704 = vmatpush1.bf16.xpose.msra.mxu0 0
        %1705 = vmatprep.subr.bf16.mxu0 0
        %1706 = vmatpush1.bf16.xpose.msra.mxu0 0
        %1707 = vmatprep.subr.bf16.mxu0 0
        %1708 = vmatpush1.bf16.xpose.msra.mxu0 0
        %1709 = vmatprep.subr.bf16.mxu0 0
        %1710 = vmatpush1.bf16.xpose.msra.mxu0 0
        %1711 = vmatprep.subr.bf16.mxu0 0
        %1712 = vmatpush1.bf16.xpose.msra.mxu0 0
        %1713 = vmatprep.subr.bf16.mxu0 0
        %1714 = vmatpush1.bf16.xpose.msra.mxu0 0
        %1715 = vmatprep.mubr.bf16.mxu0 0
        %1716 = vmatmul.mubr.bf16.gmra.mrb[0].mxu0 %v1678
        %v1717 = vpop.f32.mrb[0].mxu0
        %v1718 = vadd.f32 0.0, %v1717
        %v1719 = vpop.f32.mrb[0].mxu0
        %v1720 = vpop.f32.mrb[0].mxu0
        %v1721 = vadd.f32 0.0, %v1720
        %v1722 = vpop.f32.mrb[0].mxu0
        %1723 = vdwg.mxu0
        %v1724 = vsel %vm1156, %v1718, -inf
        %1725 = vmax.xlane.f32.xlu0 %v1724
        %v1726 = vpop.xlane.xlu0 %1725
        %v1727 = vsel %vm1156, %v1721, -inf
        %1728 = vmax.xlane.f32.xlu0 %v1727
        %v1729 = vpop.xlane.xlu0 %1728
        %v1730 = vsub.f32 %v1718, %v1726
        %v1731 = vsub.f32 %v1721, %v1729
        %v1732 = vmul.f32 %v1730, 1.442695
        %v1733 = vpow.pop %v1732
        %v1734 = vmul.f32 %v1731, 1.442695
        %v1735 = vpow.pop %v1734
        %v1736 = vsel %vm1156, %v1733, 0.0
        %1737 = vadd.xlane.f32.xlu0 %v1736
        %v1738 = vpop.xlane.xlu0 %1737
        %v1739 = vsel %vm1156, %v1735, 0.0
        %1740 = vadd.xlane.f32.xlu0 %v1739
        %v1741 = vpop.xlane.xlu0 %1740
        %v1742 = vrcp.pop %v1738
        %v1743 = vrcp.pop %v1741
        %v1744 = vmul.f32 %v1733, %v1742
        %v1745 = vmul.f32 %v1735, %v1743
        %v1746 = vpack.c.bf16 %v1745, %v1744
        %1748 = vrot.lane.b32.xlu0 %v1552, 120
        %v1749 = vpop.permute.xlu0 %1748
        %v1751 = vsel %vm1156, %v1746, 0
        %v1754 = vsel %vm1626, %v1749, 0
        %1756 = vmatprep.subr.bf16.mxu0 0
        %1757 = vmatpush1.bf16.msra.mxu0 %v1754
        %1758 = vmatprep.subr.bf16.mxu0 0
        %1759 = vmatpush1.bf16.msra.mxu0 0
        %1760 = vmatprep.subr.bf16.mxu0 0
        %1761 = vmatpush1.bf16.msra.mxu0 0
        %1762 = vmatprep.subr.bf16.mxu0 0
        %1763 = vmatpush1.bf16.msra.mxu0 0
        %1764 = vmatprep.subr.bf16.mxu0 0
        %1765 = vmatpush1.bf16.msra.mxu0 0
        %1766 = vmatprep.subr.bf16.mxu0 0
        %1767 = vmatpush1.bf16.msra.mxu0 0
        %1768 = vmatprep.subr.bf16.mxu0 0
        %1769 = vmatpush1.bf16.msra.mxu0 0
        %1770 = vmatprep.subr.bf16.mxu0 0
        %1771 = vmatpush1.bf16.msra.mxu0 0
        %1772 = vmatprep.subr.bf16.mxu0 0
        %1773 = vmatpush1.bf16.msra.mxu0 0
        %1774 = vmatprep.subr.bf16.mxu0 0
        %1775 = vmatpush1.bf16.msra.mxu0 0
        %1776 = vmatprep.subr.bf16.mxu0 0
        %1777 = vmatpush1.bf16.msra.mxu0 0
        %1778 = vmatprep.subr.bf16.mxu0 0
        %1779 = vmatpush1.bf16.msra.mxu0 0
        %1780 = vmatprep.subr.bf16.mxu0 0
        %1781 = vmatpush1.bf16.msra.mxu0 0
        %1782 = vmatprep.subr.bf16.mxu0 0
        %1783 = vmatpush1.bf16.msra.mxu0 0
        %1784 = vmatprep.subr.bf16.mxu0 0
        %1785 = vmatpush1.bf16.msra.mxu0 0
        %1786 = vmatprep.subr.bf16.mxu0 0
        %1787 = vmatpush1.bf16.msra.mxu0 0
        %1788 = vmatprep.mubr.bf16.mxu0 0
        %1789 = vmatmul.mubr.bf16.gmra.mrb[0].mxu0 %v1751
        %v1790 = vpop.f32.mrb[0].mxu0
        %v1791 = vadd.f32 0.0, %v1790
        %v1792 = vpop.f32.mrb[0].mxu0
        %v1793 = vpop.f32.mrb[0].mxu0
        %v1794 = vadd.f32 0.0, %v1793
        %v1795 = vpop.f32.mrb[0].mxu0
        %1796 = vdwg.mxu0
        %1797 = vrot.lane.b32.xlu0 %v1550, 112
        %v1798 = vpop.permute.xlu0 %1797
        %1799 = vrot.lane.b32.xlu0 %v1551, 112
        %v1800 = vpop.permute.xlu0 %1799
        %v1802 = vsel %vm1156, %v1798, 0
        %v1805 = vsel %vm1156, %v1800, 0
        %1807 = vmatprep.subr.bf16.mxu0 0
        %1808 = vmatpush1.bf16.xpose.msra.mxu0 %v1805
        %1809 = vmatprep.subr.bf16.mxu0 0
        %1810 = vmatpush1.bf16.xpose.msra.mxu0 0
        %1811 = vmatprep.subr.bf16.mxu0 0
        %1812 = vmatpush1.bf16.xpose.msra.mxu0 0
        %1813 = vmatprep.subr.bf16.mxu0 0
        %1814 = vmatpush1.bf16.xpose.msra.mxu0 0
        %1815 = vmatprep.subr.bf16.mxu0 0
        %1816 = vmatpush1.bf16.xpose.msra.mxu0 0
        %1817 = vmatprep.subr.bf16.mxu0 0
        %1818 = vmatpush1.bf16.xpose.msra.mxu0 0
        %1819 = vmatprep.subr.bf16.mxu0 0
        %1820 = vmatpush1.bf16.xpose.msra.mxu0 0
        %1821 = vmatprep.subr.bf16.mxu0 0
        %1822 = vmatpush1.bf16.xpose.msra.mxu0 0
        %1823 = vmatprep.subr.bf16.mxu0 0
        %1824 = vmatpush1.bf16.xpose.msra.mxu0 0
        %1825 = vmatprep.subr.bf16.mxu0 0
        %1826 = vmatpush1.bf16.xpose.msra.mxu0 0
        %1827 = vmatprep.subr.bf16.mxu0 0
        %1828 = vmatpush1.bf16.xpose.msra.mxu0 0
        %1829 = vmatprep.subr.bf16.mxu0 0
        %1830 = vmatpush1.bf16.xpose.msra.mxu0 0
        %1831 = vmatprep.subr.bf16.mxu0 0
        %1832 = vmatpush1.bf16.xpose.msra.mxu0 0
        %1833 = vmatprep.subr.bf16.mxu0 0
        %1834 = vmatpush1.bf16.xpose.msra.mxu0 0
        %1835 = vmatprep.subr.bf16.mxu0 0
        %1836 = vmatpush1.bf16.xpose.msra.mxu0 0
        %1837 = vmatprep.subr.bf16.mxu0 0
        %1838 = vmatpush1.bf16.xpose.msra.mxu0 0
        %1839 = vmatprep.mubr.bf16.mxu0 0
        %1840 = vmatmul.mubr.bf16.gmra.mrb[0].mxu0 %v1802
        %v1841 = vpop.f32.mrb[0].mxu0
        %v1842 = vadd.f32 0.0, %v1841
        %v1843 = vpop.f32.mrb[0].mxu0
        %v1844 = vpop.f32.mrb[0].mxu0
        %v1845 = vadd.f32 0.0, %v1844
        %v1846 = vpop.f32.mrb[0].mxu0
        %1847 = vdwg.mxu0
        %v1848 = vsel %vm1156, %v1842, -inf
        %1849 = vmax.xlane.f32.xlu0 %v1848
        %v1850 = vpop.xlane.xlu0 %1849
        %v1851 = vsel %vm1156, %v1845, -inf
        %1852 = vmax.xlane.f32.xlu0 %v1851
        %v1853 = vpop.xlane.xlu0 %1852
        %v1854 = vsub.f32 %v1842, %v1850
        %v1855 = vsub.f32 %v1845, %v1853
        %v1856 = vmul.f32 %v1854, 1.442695
        %v1857 = vpow.pop %v1856
        %v1858 = vmul.f32 %v1855, 1.442695
        %v1859 = vpow.pop %v1858
        %v1860 = vsel %vm1156, %v1857, 0.0
        %1861 = vadd.xlane.f32.xlu0 %v1860
        %v1862 = vpop.xlane.xlu0 %1861
        %v1863 = vsel %vm1156, %v1859, 0.0
        %1864 = vadd.xlane.f32.xlu0 %v1863
        %v1865 = vpop.xlane.xlu0 %1864
        %v1866 = vrcp.pop %v1862
        %v1867 = vrcp.pop %v1865
        %v1868 = vmul.f32 %v1857, %v1866
        %v1869 = vmul.f32 %v1859, %v1867
        %v1870 = vpack.c.bf16 %v1869, %v1868
        %1871 = vrot.lane.b32.xlu0 %v1552, 112
        %v1872 = vpop.permute.xlu0 %1871
        %v1874 = vsel %vm1156, %v1870, 0
        %v1877 = vsel %vm1626, %v1872, 0
        %1879 = vmatprep.subr.bf16.mxu0 0
        %1880 = vmatpush1.bf16.msra.mxu0 %v1877
        %1881 = vmatprep.subr.bf16.mxu0 0
        %1882 = vmatpush1.bf16.msra.mxu0 0
        %1883 = vmatprep.subr.bf16.mxu0 0
        %1884 = vmatpush1.bf16.msra.mxu0 0
        %1885 = vmatprep.subr.bf16.mxu0 0
        %1886 = vmatpush1.bf16.msra.mxu0 0
        %1887 = vmatprep.subr.bf16.mxu0 0
        %1888 = vmatpush1.bf16.msra.mxu0 0
        %1889 = vmatprep.subr.bf16.mxu0 0
        %1890 = vmatpush1.bf16.msra.mxu0 0
        %1891 = vmatprep.subr.bf16.mxu0 0
        %1892 = vmatpush1.bf16.msra.mxu0 0
        %1893 = vmatprep.subr.bf16.mxu0 0
        %1894 = vmatpush1.bf16.msra.mxu0 0
        %1895 = vmatprep.subr.bf16.mxu0 0
        %1896 = vmatpush1.bf16.msra.mxu0 0
        %1897 = vmatprep.subr.bf16.mxu0 0
        %1898 = vmatpush1.bf16.msra.mxu0 0
        %1899 = vmatprep.subr.bf16.mxu0 0
        %1900 = vmatpush1.bf16.msra.mxu0 0
        %1901 = vmatprep.subr.bf16.mxu0 0
        %1902 = vmatpush1.bf16.msra.mxu0 0
        %1903 = vmatprep.subr.bf16.mxu0 0
        %1904 = vmatpush1.bf16.msra.mxu0 0
        %1905 = vmatprep.subr.bf16.mxu0 0
        %1906 = vmatpush1.bf16.msra.mxu0 0
        %1907 = vmatprep.subr.bf16.mxu0 0
        %1908 = vmatpush1.bf16.msra.mxu0 0
        %1909 = vmatprep.subr.bf16.mxu0 0
        %1910 = vmatpush1.bf16.msra.mxu0 0
        %1911 = vmatprep.mubr.bf16.mxu0 0
        %1912 = vmatmul.mubr.bf16.gmra.mrb[0].mxu0 %v1874
        %v1913 = vpop.f32.mrb[0].mxu0
        %v1914 = vadd.f32 0.0, %v1913
        %v1915 = vpop.f32.mrb[0].mxu0
        %v1916 = vpop.f32.mrb[0].mxu0
        %v1917 = vadd.f32 0.0, %v1916
        %v1918 = vpop.f32.mrb[0].mxu0
        %1919 = vdwg.mxu0
        %1920 = vrot.lane.b32.xlu0 %v1550, 104
        %v1921 = vpop.permute.xlu0 %1920
        %1922 = vrot.lane.b32.xlu0 %v1551, 104
        %v1923 = vpop.permute.xlu0 %1922
        %v1925 = vsel %vm1156, %v1921, 0
        %v1928 = vsel %vm1156, %v1923, 0
        %1930 = vmatprep.subr.bf16.mxu0 0
        %1931 = vmatpush1.bf16.xpose.msra.mxu0 %v1928
        %1932 = vmatprep.subr.bf16.mxu0 0
        %1933 = vmatpush1.bf16.xpose.msra.mxu0 0
        %1934 = vmatprep.subr.bf16.mxu0 0
        %1935 = vmatpush1.bf16.xpose.msra.mxu0 0
        %1936 = vmatprep.subr.bf16.mxu0 0
        %1937 = vmatpush1.bf16.xpose.msra.mxu0 0
        %1938 = vmatprep.subr.bf16.mxu0 0
        %1939 = vmatpush1.bf16.xpose.msra.mxu0 0
        %1940 = vmatprep.subr.bf16.mxu0 0
        %1941 = vmatpush1.bf16.xpose.msra.mxu0 0
        %1942 = vmatprep.subr.bf16.mxu0 0
        %1943 = vmatpush1.bf16.xpose.msra.mxu0 0
        %1944 = vmatprep.subr.bf16.mxu0 0
        %1945 = vmatpush1.bf16.xpose.msra.mxu0 0
        %1946 = vmatprep.subr.bf16.mxu0 0
        %1947 = vmatpush1.bf16.xpose.msra.mxu0 0
        %1948 = vmatprep.subr.bf16.mxu0 0
        %1949 = vmatpush1.bf16.xpose.msra.mxu0 0
        %1950 = vmatprep.subr.bf16.mxu0 0
        %1951 = vmatpush1.bf16.xpose.msra.mxu0 0
        %1952 = vmatprep.subr.bf16.mxu0 0
        %1953 = vmatpush1.bf16.xpose.msra.mxu0 0
        %1954 = vmatprep.subr.bf16.mxu0 0
        %1955 = vmatpush1.bf16.xpose.msra.mxu0 0
        %1956 = vmatprep.subr.bf16.mxu0 0
        %1957 = vmatpush1.bf16.xpose.msra.mxu0 0
        %1958 = vmatprep.subr.bf16.mxu0 0
        %1959 = vmatpush1.bf16.xpose.msra.mxu0 0
        %1960 = vmatprep.subr.bf16.mxu0 0
        %1961 = vmatpush1.bf16.xpose.msra.mxu0 0
        %1962 = vmatprep.mubr.bf16.mxu0 0
        %1963 = vmatmul.mubr.bf16.gmra.mrb[0].mxu0 %v1925
        %v1964 = vpop.f32.mrb[0].mxu0
        %v1965 = vadd.f32 0.0, %v1964
        %v1966 = vpop.f32.mrb[0].mxu0
        %v1967 = vpop.f32.mrb[0].mxu0
        %v1968 = vadd.f32 0.0, %v1967
        %v1969 = vpop.f32.mrb[0].mxu0
        %1970 = vdwg.mxu0
        %v1971 = vsel %vm1156, %v1965, -inf
        %1972 = vmax.xlane.f32.xlu0 %v1971
        %v1973 = vpop.xlane.xlu0 %1972
        %v1974 = vsel %vm1156, %v1968, -inf
        %1975 = vmax.xlane.f32.xlu0 %v1974
        %v1976 = vpop.xlane.xlu0 %1975
        %v1977 = vsub.f32 %v1965, %v1973
        %v1978 = vsub.f32 %v1968, %v1976
        %v1979 = vmul.f32 %v1977, 1.442695
        %v1980 = vpow.pop %v1979
        %v1981 = vmul.f32 %v1978, 1.442695
        %v1982 = vpow.pop %v1981
        %v1983 = vsel %vm1156, %v1980, 0.0
        %1984 = vadd.xlane.f32.xlu0 %v1983
        %v1985 = vpop.xlane.xlu0 %1984
        %v1986 = vsel %vm1156, %v1982, 0.0
        %1987 = vadd.xlane.f32.xlu0 %v1986
        %v1988 = vpop.xlane.xlu0 %1987
        %v1989 = vrcp.pop %v1985
        %v1990 = vrcp.pop %v1988
        %v1991 = vmul.f32 %v1980, %v1989
        %v1992 = vmul.f32 %v1982, %v1990
        %v1993 = vpack.c.bf16 %v1992, %v1991
        %1994 = vrot.lane.b32.xlu0 %v1552, 104
        %v1995 = vpop.permute.xlu0 %1994
        %v1997 = vsel %vm1156, %v1993, 0
        %v2000 = vsel %vm1626, %v1995, 0
        %2002 = vmatprep.subr.bf16.mxu0 0
        %2003 = vmatpush1.bf16.msra.mxu0 %v2000
        %2004 = vmatprep.subr.bf16.mxu0 0
        %2005 = vmatpush1.bf16.msra.mxu0 0
        %2006 = vmatprep.subr.bf16.mxu0 0
        %2007 = vmatpush1.bf16.msra.mxu0 0
        %2008 = vmatprep.subr.bf16.mxu0 0
        %2009 = vmatpush1.bf16.msra.mxu0 0
        %2010 = vmatprep.subr.bf16.mxu0 0
        %2011 = vmatpush1.bf16.msra.mxu0 0
        %2012 = vmatprep.subr.bf16.mxu0 0
        %2013 = vmatpush1.bf16.msra.mxu0 0
        %2014 = vmatprep.subr.bf16.mxu0 0
        %2015 = vmatpush1.bf16.msra.mxu0 0
        %2016 = vmatprep.subr.bf16.mxu0 0
        %2017 = vmatpush1.bf16.msra.mxu0 0
        %2018 = vmatprep.subr.bf16.mxu0 0
        %2019 = vmatpush1.bf16.msra.mxu0 0
        %2020 = vmatprep.subr.bf16.mxu0 0
        %2021 = vmatpush1.bf16.msra.mxu0 0
        %2022 = vmatprep.subr.bf16.mxu0 0
        %2023 = vmatpush1.bf16.msra.mxu0 0
        %2024 = vmatprep.subr.bf16.mxu0 0
        %2025 = vmatpush1.bf16.msra.mxu0 0
        %2026 = vmatprep.subr.bf16.mxu0 0
        %2027 = vmatpush1.bf16.msra.mxu0 0
        %2028 = vmatprep.subr.bf16.mxu0 0
        %2029 = vmatpush1.bf16.msra.mxu0 0
        %2030 = vmatprep.subr.bf16.mxu0 0
        %2031 = vmatpush1.bf16.msra.mxu0 0
        %2032 = vmatprep.subr.bf16.mxu0 0
        %2033 = vmatpush1.bf16.msra.mxu0 0
        %2034 = vmatprep.mubr.bf16.mxu0 0
        %2035 = vmatmul.mubr.bf16.gmra.mrb[0].mxu0 %v1997
        %v2036 = vpop.f32.mrb[0].mxu0
        %v2037 = vadd.f32 0.0, %v2036
        %v2038 = vpop.f32.mrb[0].mxu0
        %v2039 = vpop.f32.mrb[0].mxu0
        %v2040 = vadd.f32 0.0, %v2039
        %v2041 = vpop.f32.mrb[0].mxu0
        %2042 = vdwg.mxu0
        %2045 = vrot.lane.b32.xlu0 %v1791, 8
        %v2046 = vpop.permute.xlu0 %2045
        %2047 = vrot.lane.b32.xlu0 %v1794, 8
        %v2048 = vpop.permute.xlu0 %2047
        %2053 = vrot.lane.b32.xlu0 %v1914, 16
        %v2054 = vpop.permute.xlu0 %2053
        %2055 = vrot.lane.b32.xlu0 %v1917, 16
        %v2056 = vpop.permute.xlu0 %2055
        %2061 = vrot.lane.b32.xlu0 %v2037, 24
        %v2062 = vpop.permute.xlu0 %2061
        %2063 = vrot.lane.b32.xlu0 %v2040, 24
        %v2064 = vpop.permute.xlu0 %2063
        %v2067 = vsel %vm1156, %v1665, %v2046
        %v2068 = vsel %vm1156, %v1668, %v2048
        %v2069 = vsel %vm688, %v2067, %v2054
        %v2070 = vsel %vm688, %v2068, %v2056
        %v2071 = vsel %vm1159, %v2069, %v2062
        %v2072 = vsel %vm1159, %v2070, %v2064
        %v2073 = vsel %vm1161, %v2071, 0.0
        %v2074 = vsel %vm1161, %v2072, 0.0
        %v2075 = vadd.f32 %v1329, %v2073
        %v2076 = vadd.f32 %v1332, %v2074
        %v2077 = vpack.c.bf16 %v2076, %v2075
        %v2078 = vld [vmem:[#allocation22] sm:$0xf]
        %v2079 = vld [vmem:[#allocation22 + $0x4] sm:$0xf]
        %v2080 = vld [vmem:[#allocation22 + $0x8] sm:$0xf]
        %v2081 = vld [vmem:[#allocation22 + $0xc] sm:$0xf]
        %v2082 = vld [vmem:[#allocation22 + $0x10] sm:$0xf]
        %v2083 = vld [vmem:[#allocation22 + $0x14] sm:$0xf]
        %v2084 = vld [vmem:[#allocation22 + $0x18] sm:$0xf]
        %v2085 = vld [vmem:[#allocation22 + $0x1c] sm:$0xf]
        %v2086 = vld [vmem:[#allocation22 + $0x20] sm:$0xf]
        %v2087 = vld [vmem:[#allocation22 + $0x24] sm:$0xf]
        %v2088 = vld [vmem:[#allocation22 + $0x28] sm:$0xf]
        %v2089 = vld [vmem:[#allocation22 + $0x2c] sm:$0xf]
        %v2090 = vld [vmem:[#allocation22 + $0x30] sm:$0xf]
        %v2091 = vld [vmem:[#allocation22 + $0x34] sm:$0xf]
        %v2092 = vld [vmem:[#allocation22 + $0x38] sm:$0xf]
        %v2093 = vld [vmem:[#allocation22 + $0x3c] sm:$0xf]
        %v2094 = vld [vmem:[#allocation23] sm:$0x1]
        %v2096 = vlaneseq
        %v2097 = vshrl.u32 %v2096, 7
        %v2098 = vsub.s32 0, %v2097
        %v2099 = vrot.slane %v2094, %v2098
        %v2117 = vunpack.c.l.b16 %v2078
        %v2118 = vunpack.c.l.b16 %v2079
        %v2119 = vunpack.c.l.b16 %v2080
        %v2120 = vunpack.c.l.b16 %v2081
        %v2121 = vunpack.c.l.b16 %v2082
        %v2122 = vunpack.c.l.b16 %v2083
        %v2123 = vunpack.c.l.b16 %v2084
        %v2124 = vunpack.c.l.b16 %v2085
        %v2125 = vunpack.c.l.b16 %v2086
        %v2126 = vunpack.c.l.b16 %v2087
        %v2127 = vunpack.c.l.b16 %v2088
        %v2128 = vunpack.c.l.b16 %v2089
        %v2129 = vunpack.c.l.b16 %v2090
        %v2130 = vunpack.c.l.b16 %v2091
        %v2131 = vunpack.c.l.b16 %v2092
        %v2132 = vunpack.c.l.b16 %v2093
        %v2133 = vpack.c.b16 %v2118, %v2117
        %v2134 = vpack.c.b16 %v2120, %v2119
        %v2135 = vpack.c.b16 %v2122, %v2121
        %v2136 = vpack.c.b16 %v2124, %v2123
        %v2137 = vpack.c.b16 %v2126, %v2125
        %v2138 = vpack.c.b16 %v2128, %v2127
        %v2139 = vpack.c.b16 %v2130, %v2129
        %v2140 = vpack.c.b16 %v2132, %v2131
        %2149 = vmatprep.subr.bf16.mxu0 0
        %2150 = vmatpush1.bf16.msra.mxu0 %v2133
        %2151 = vmatprep.subr.bf16.mxu0 0
        %2152 = vmatpush1.bf16.msra.mxu0 %v2134
        %2153 = vmatprep.subr.bf16.mxu0 0
        %2154 = vmatpush1.bf16.msra.mxu0 %v2135
        %2155 = vmatprep.subr.bf16.mxu0 0
        %2156 = vmatpush1.bf16.msra.mxu0 %v2136
        %2157 = vmatprep.subr.bf16.mxu0 0
        %2158 = vmatpush1.bf16.msra.mxu0 %v2137
        %2159 = vmatprep.subr.bf16.mxu0 0
        %2160 = vmatpush1.bf16.msra.mxu0 %v2138
        %2161 = vmatprep.subr.bf16.mxu0 0
        %2162 = vmatpush1.bf16.msra.mxu0 %v2139
        %2163 = vmatprep.subr.bf16.mxu0 0
        %2164 = vmatpush1.bf16.msra.mxu0 %v2140
        %2165 = vmatprep.subr.bf16.mxu0 0
        %2166 = vmatpush1.bf16.msra.mxu0 0
        %2167 = vmatprep.subr.bf16.mxu0 0
        %2168 = vmatpush1.bf16.msra.mxu0 0
        %2169 = vmatprep.subr.bf16.mxu0 0
        %2170 = vmatpush1.bf16.msra.mxu0 0
        %2171 = vmatprep.subr.bf16.mxu0 0
        %2172 = vmatpush1.bf16.msra.mxu0 0
        %2173 = vmatprep.subr.bf16.mxu0 0
        %2174 = vmatpush1.bf16.msra.mxu0 0
        %2175 = vmatprep.subr.bf16.mxu0 0
        %2176 = vmatpush1.bf16.msra.mxu0 0
        %2177 = vmatprep.subr.bf16.mxu0 0
        %2178 = vmatpush1.bf16.msra.mxu0 0
        %2179 = vmatprep.subr.bf16.mxu0 0
        %2180 = vmatpush1.bf16.msra.mxu0 0
        %2181 = vmatprep.mubr.bf16.mxu0 0
        %2182 = vmatmul.mubr.bf16.gmra.mrb[0].mxu0 %v2077
        %v2183 = vpop.f32.mrb[0].mxu0
        %v2184 = vadd.f32 %v2099, %v2183
        %v2185 = vpop.f32.mrb[0].mxu0
        %v2186 = vpop.f32.mrb[0].mxu0
        %v2187 = vadd.f32 %v2099, %v2186
        %v2188 = vpop.f32.mrb[0].mxu0
        %2189 = vdwg.mxu0
        %v2190 = vmax.f32 %v2184, 0.0
        %v2191 = vmax.f32 %v2187, 0.0
        %v2192 = vadd.f32 %v2075, %v2190
        %v2193 = vadd.f32 %v2076, %v2191
        %2194 = vst [vmem:[%s662] sm:$0xff] %v2192
        %2195 = vst [vmem:[%s662 + $0x8] sm:$0xff] %v2193
        %s2196 = sand.u32 %s345, 1
        %s2197 = scalar_lea.sflag [#allocation4], %s2196
        %s2198 = sand.u32 %s345, 1
        %s2199 = smul.addr %s2198, 16
        %s2200 = scalar_lea.vmem [#allocation25], %s2199
        // Predicated region
        $region133: #{tpu_custom_call.1} parent=75 // pred_check
          %p2201 = pneg %p355
        $region134: #{tpu_custom_call.1} parent=75 // pred_check_branch
          %2203 = sbr.rel (%p2201) target = $region136
        $region135: #{tpu_custom_call.1} parent=75 // pred_region
          %s2204 = smul.u32 2, %s38
          %s2206 = ssub.s32 256, 256
          %2207 = vsyncadd %s2197, %s2206
          %s2208 = smul.addr %s2204, 128
          %s2209 = scalar_lea.hbm %s14, %s2208
          %s2210 = sshll.u32 %s2200, 4
          %s2211 = int_to_ptr.vmem [resolvable:$true] %s2210
          %2216 = dma.vmem_to_hbm [thread:$0]  %s2211, 256, %s2209, %s2197, 128, 128, 8
        $region136: #{tpu_custom_call.1} parent=75 // pred_fallthru
          _
      $region76: #{tpu_custom_call.1} parent=5 // pred_fallthru
        _
      %p2217 = scmp.le.s32.totalorder 2, %s33
      // Predicated region
      $region137: #{tpu_custom_call.1} parent=5 // pred_check
        %p2218 = pneg %p2217
      $region138: #{tpu_custom_call.1} parent=5 // pred_check_branch
        %2220 = sbr.rel (%p2218) target = $region140
      $region139: #{tpu_custom_call.1} parent=5 // pred_region
        %s2221 = ssub.s32 %s33, 2
        // Predicated region
        $region141: #{tpu_custom_call.1} parent=139 // pred_check
          %p2222 = pneg %p361
        $region142: #{tpu_custom_call.1} parent=139 // pred_check_branch
          %2224 = sbr.rel (%p2222) target = $region144
        $region143: #{tpu_custom_call.1} parent=139 // pred_region
          %s2225 = sand.u32 %s346, 1
          %s2226 = scalar_lea.sflag [#allocation4], %s2225
          %s2227 = sand.u32 %s346, 1
          %s2228 = smul.addr %s2227, 16
          %s2229 = scalar_lea.vmem [#allocation25], %s2228
          %2230 = dma.done %s2226, 256
        $region144: #{tpu_custom_call.1} parent=139 // pred_fallthru
          _
      $region140: #{tpu_custom_call.1} parent=5 // pred_fallthru
        _
    $region6: #{tpu_custom_call.1} parent=1 // loop_footer
      %s37 = sadd.s32 1, %s33
    $region7: #{tpu_custom_call.1} parent=1 // loop_footer_branch
      %32 = sbr.rel target = $region3
    $region8: #{tpu_custom_call.1} parent=1 // loop_exit
      _
    %2231 = vsyncpa [#allocation3], 1
    %s2232 = scalar_lea.sflag [#allocation3], 1
    %2233 = vsyncpa %s2232, 1
    %2234 = vsyncpa [#allocation6], 1
    %2235 = vsyncpa [#allocation9], 1
    %2236 = vsyncpa [#allocation12], 1
    %2237 = vsyncpa [#allocation15], 1
    %2238 = vsyncpa [#allocation18], 1
    %2239 = vsyncpa [#allocation21], 1
    %2240 = vsyncpa [#allocation24], 1
    %2241 = vsyncpa [#allocation4], 1
    %s2242 = scalar_lea.sflag [#allocation4], 1
    %2243 = vsyncpa %s2242, 1

</llo_original>
